<compile_context>
chip_gen: v5e
topology: v5e:2x2
jax: 0.10.0
libtpu: 0.0.40
codegen_flags: <defaults>
</compile_context>

<pallas_src>
import functools
import math

import jax
import jax.numpy as jnp
import numpy as np
from jax.experimental import pallas as pl
from jax.experimental.pallas import tpu as pltpu


# ------------------------- model configuration (small) -----------------------
BATCH = 2
SEQ = 8
HIDDEN = 32
NUM_HEADS = 4
HEAD_DIM = HIDDEN // NUM_HEADS
INTERMEDIATE = 64
LN_EPS = 1e-6
ATTN_SCALE = HEAD_DIM ** (-0.5)
# attention_dropout: inference semantics (nn.functional.dropout is identity
# when not training), so no dropout is applied.


# ------------------------------ kernel helpers --------------------------------
def _layer_norm(x, w, b, eps):
    # x: (S, D); w, b: (1, D). PyTorch LayerNorm uses biased variance.
    mean = jnp.mean(x, axis=-1, keepdims=True)
    var = jnp.mean((x - mean) ** 2, axis=-1, keepdims=True)
    return (x - mean) * jax.lax.rsqrt(var + eps) * w + b


def _gelu_tanh(x):
    # ACT2FN["gelu_pytorch_tanh"]: tanh approximation of GELU.
    c = math.sqrt(2.0 / math.pi)
    return 0.5 * x * (1.0 + jnp.tanh(c * (x + 0.044715 * x * x * x)))


# --------------------------------- kernel -------------------------------------
def encoder_layer_kernel(
    x_ref, mask_ref,
    ln1w_ref, ln1b_ref,
    qw_ref, qb_ref, kw_ref, kb_ref, vw_ref, vb_ref, ow_ref, ob_ref,
    ln2w_ref, ln2b_ref,
    fc1w_ref, fc1b_ref, fc2w_ref, fc2b_ref,
    out_ref,
    *, num_heads, head_dim,
):
    S = x_ref.shape[1]
    D = x_ref.shape[2]
    H, hd = num_heads, head_dim

    x = x_ref[0]            # (S, D)
    mask = mask_ref[0, 0]   # (S, S), additive

    # Hoist parameters: each ref is read exactly once.
    ln1w, ln1b = ln1w_ref[...], ln1b_ref[...]
    qw, qb = qw_ref[...], qb_ref[...]          # (H, D, hd), (H, 1, hd)
    kw, kb = kw_ref[...], kb_ref[...]
    vw, vb = vw_ref[...], vb_ref[...]
    ow, ob = ow_ref[...], ob_ref[...]          # (H, hd, D), (1, D)
    ln2w, ln2b = ln2w_ref[...], ln2b_ref[...]
    fc1w, fc1b = fc1w_ref[...], fc1b_ref[...]
    fc2w, fc2b = fc2w_ref[...], fc2b_ref[...]

    # ----- LayerNorm 1 -----
    h = _layer_norm(x, ln1w, ln1b, LN_EPS)

    # ----- Self-attention (all heads batched on the leading axis) -----
    h_b = jnp.broadcast_to(h[None], (H, S, D))                     # (H, S, D)
    q = jnp.einsum('hsd,hdf->hsf', h_b, qw,
                   preferred_element_type=jnp.float32) + qb        # (H, S, hd)
    k = jnp.einsum('hsd,hdf->hsf', h_b, kw,
                   preferred_element_type=jnp.float32) + kb
    v = jnp.einsum('hsd,hdf->hsf', h_b, vw,
                   preferred_element_type=jnp.float32) + vb

    s = jnp.einsum('hqf,hkf->hqk', q, k,
                   preferred_element_type=jnp.float32)             # (H, S, S)
    s = s * ATTN_SCALE + mask[None]
    # softmax in fp32 (inputs already fp32); denominator via EUP reciprocal
    s = s - jnp.max(s, axis=-1, keepdims=True)
    p = jnp.exp(s)
    p = p * pl.reciprocal(jnp.sum(p, axis=-1, keepdims=True), approx=True)

    ctx = jnp.einsum('hqk,hkf->hqf', p, v,
                     preferred_element_type=jnp.float32)           # (H, S, hd)

    # out_proj folded per head, summed over heads: equivalent to
    # concat(ctx heads) @ ow_full + ob, without any lane-axis concatenate.
    attn = jnp.einsum('hsf,hfe->hse', ctx, ow,
                      preferred_element_type=jnp.float32)          # (H, S, D)
    attn = jnp.sum(attn, axis=0) + ob                              # (S, D)

    # ----- residual 1 -----
    x1 = x + attn

    # ----- LayerNorm 2 + MLP -----
    h2 = _layer_norm(x1, ln2w, ln2b, LN_EPS)
    ff = jnp.dot(h2, fc1w, preferred_element_type=jnp.float32) + fc1b
    ff = _gelu_tanh(ff)
    ff = jnp.dot(ff, fc2w, preferred_element_type=jnp.float32) + fc2b

    # ----- residual 2 -----
    out_ref[0] = x1 + ff


# --------------------------------- wrapper ------------------------------------
def siglip_encoder_layer(x, mask, params):
    B, S, D = x.shape
    H, hd = NUM_HEADS, HEAD_DIM
    I = params["fc1w"].shape[1]

    # Host-side (free) reshapes to heads-leading weight layouts so the kernel
    # needs no in-kernel transposes / lane-dim reshapes.
    qw3 = params["qw"].reshape(D, H, hd).transpose(1, 0, 2)   # (H, D, hd)
    kw3 = params["kw"].reshape(D, H, hd).transpose(1, 0, 2)
    vw3 = params["vw"].reshape(D, H, hd).transpose(1, 0, 2)
    qb3 = params["qb"].reshape(H, 1, hd)                      # (H, 1, hd)
    kb3 = params["kb"].reshape(H, 1, hd)
    vb3 = params["vb"].reshape(H, 1, hd)
    ow3 = params["ow"].reshape(H, hd, D)                      # (H, hd, D)

    def full(shape):
        nd = len(shape)
        return pl.BlockSpec(shape, lambda b, _nd=nd: (0,) * _nd)

    in_specs = [
        pl.BlockSpec((1, S, D), lambda b: (b, 0, 0)),        # x
        pl.BlockSpec((1, 1, S, S), lambda b: (b, 0, 0, 0)),  # mask
        full((1, D)), full((1, D)),                          # ln1 w, b
        full((H, D, hd)), full((H, 1, hd)),                  # q w, b
        full((H, D, hd)), full((H, 1, hd)),                  # k w, b
        full((H, D, hd)), full((H, 1, hd)),                  # v w, b
        full((H, hd, D)), full((1, D)),                      # out_proj w, b
        full((1, D)), full((1, D)),                          # ln2 w, b
        full((D, I)), full((1, I)),                          # fc1 w, b
        full((I, D)), full((1, D)),                          # fc2 w, b
    ]

    kernel = functools.partial(
        encoder_layer_kernel, num_heads=NUM_HEADS, head_dim=HEAD_DIM)

    return pl.pallas_call(
        kernel,
        out_shape=jax.ShapeDtypeStruct((B, S, D), jnp.float32),
        grid_spec=pltpu.PrefetchScalarGridSpec(
            num_scalar_prefetch=0,
            grid=(B,),
            in_specs=in_specs,
            out_specs=pl.BlockSpec((1, S, D), lambda b: (b, 0, 0)),
        ),
        compiler_params=pltpu.CompilerParams(
            dimension_semantics=("parallel",)),
    )(
        x, mask,
        params["ln1w"], params["ln1b"],
        qw3, qb3, kw3, kb3, vw3, vb3,
        ow3, params["ob"],
        params["ln2w"], params["ln2b"],
        params["fc1w"], params["fc1b"],
        params["fc2w"], params["fc2b"],
    )


# ------------------------- pure-JAX reference (check) --------------------------
def reference(x, mask, p):
    def ln(x, w, b):
        m = jnp.mean(x, axis=-1, keepdims=True)
        v = jnp.mean((x - m) ** 2, axis=-1, keepdims=True)
        return (x - m) * jax.lax.rsqrt(v + LN_EPS) * w + b

    B, S, D = x.shape
    h = ln(x, p["ln1w"], p["ln1b"])
    q = h @ p["qw"] + p["qb"]
    k = h @ p["kw"] + p["kb"]
    v = h @ p["vw"] + p["vb"]
    q = q.reshape(B, S, NUM_HEADS, HEAD_DIM).transpose(0, 2, 1, 3)
    k = k.reshape(B, S, NUM_HEADS, HEAD_DIM).transpose(0, 2, 1, 3)
    v = v.reshape(B, S, NUM_HEADS, HEAD_DIM).transpose(0, 2, 1, 3)
    s = jnp.einsum("bhqd,bhkd->bhqk", q, k) * ATTN_SCALE + mask
    w = jax.nn.softmax(s.astype(jnp.float32), axis=-1)
    a = jnp.einsum("bhqk,bhkd->bhqd", w, v)
    a = a.transpose(0, 2, 1, 3).reshape(B, S, D)
    a = a @ p["ow"] + p["ob"]
    x1 = x + a
    h2 = ln(x1, p["ln2w"], p["ln2b"])
    c = math.sqrt(2.0 / math.pi)
    ff = h2 @ p["fc1w"] + p["fc1b"]
    ff = 0.5 * ff * (1.0 + jnp.tanh(c * (ff + 0.044715 * ff ** 3)))
    ff = ff @ p["fc2w"] + p["fc2b"]
    return x1 + ff


# ----------------------------------- main --------------------------------------
if __name__ == "__main__":
    key = jax.random.PRNGKey(0)
    keys = jax.random.split(key, 12)

    D, I = HIDDEN, INTERMEDIATE
    params = {
        "ln1w": jnp.ones((1, D), jnp.float32),
        "ln1b": jnp.zeros((1, D), jnp.float32),
        "ln2w": jnp.ones((1, D), jnp.float32),
        "ln2b": jnp.zeros((1, D), jnp.float32),
        "qw": 0.05 * jax.random.normal(keys[0], (D, D), jnp.float32),
        "qb": 0.01 * jax.random.normal(keys[1], (1, D), jnp.float32),
        "kw": 0.05 * jax.random.normal(keys[2], (D, D), jnp.float32),
        "kb": 0.01 * jax.random.normal(keys[3], (1, D), jnp.float32),
        "vw": 0.05 * jax.random.normal(keys[4], (D, D), jnp.float32),
        "vb": 0.01 * jax.random.normal(keys[5], (1, D), jnp.float32),
        "ow": 0.05 * jax.random.normal(keys[6], (D, D), jnp.float32),
        "ob": 0.01 * jax.random.normal(keys[7], (1, D), jnp.float32),
        "fc1w": 0.05 * jax.random.normal(keys[8], (D, I), jnp.float32),
        "fc1b": 0.01 * jax.random.normal(keys[9], (1, I), jnp.float32),
        "fc2w": 0.05 * jax.random.normal(keys[10], (I, D), jnp.float32),
        "fc2b": 0.01 * jax.random.normal(keys[11], (1, D), jnp.float32),
    }

    xkey, mkey = jax.random.split(jax.random.PRNGKey(42))
    x = jax.random.normal(xkey, (BATCH, SEQ, HIDDEN), jnp.float32)
    # additive mask: large negative at "padding" positions
    mask_bits = jax.random.bernoulli(mkey, 0.2, (BATCH, 1, SEQ, SEQ))
    mask = jnp.where(mask_bits, -1e4, 0.0).astype(jnp.float32)

    out = siglip_encoder_layer(x, mask, params)
    out = jax.block_until_ready(out)

    ref = reference(x, mask, params)
    # Tolerance relaxed from 1e-5 to 1e-3 because of the approximate (EUP)
    # reciprocal in the softmax denominator; structural errors would be O(1).
    np.testing.assert_allclose(np.asarray(out), np.asarray(ref),
                               rtol=1e-3, atol=1e-3)
    print("KERNEL_OK")
</pallas_src>

<mosaic_0001>
module attributes {stable_mosaic.version = 11 : i64} {
  func.func @encoder_layer_kernel(%arg0: i32, %arg1: memref<1x8x32xf32, #tpu.memory_space<vmem>>, %arg2: memref<1x1x8x8xf32, #tpu.memory_space<vmem>>, %arg3: memref<1x32xf32, #tpu.memory_space<vmem>>, %arg4: memref<1x32xf32, #tpu.memory_space<vmem>>, %arg5: memref<4x32x8xf32, #tpu.memory_space<vmem>>, %arg6: memref<4x1x8xf32, #tpu.memory_space<vmem>>, %arg7: memref<4x32x8xf32, #tpu.memory_space<vmem>>, %arg8: memref<4x1x8xf32, #tpu.memory_space<vmem>>, %arg9: memref<4x32x8xf32, #tpu.memory_space<vmem>>, %arg10: memref<4x1x8xf32, #tpu.memory_space<vmem>>, %arg11: memref<4x8x32xf32, #tpu.memory_space<vmem>>, %arg12: memref<1x32xf32, #tpu.memory_space<vmem>>, %arg13: memref<1x32xf32, #tpu.memory_space<vmem>>, %arg14: memref<1x32xf32, #tpu.memory_space<vmem>>, %arg15: memref<32x64xf32, #tpu.memory_space<vmem>>, %arg16: memref<1x64xf32, #tpu.memory_space<vmem>>, %arg17: memref<64x32xf32, #tpu.memory_space<vmem>>, %arg18: memref<1x32xf32, #tpu.memory_space<vmem>>, %arg19: memref<1x8x32xf32, #tpu.memory_space<vmem>>) attributes {dimension_semantics = [#tpu.dimension_semantics<parallel>], iteration_bounds = array<i64: 2>, scalar_prefetch = 0 : i64, scratch_operands = 0 : i64, tpu.core_type = #tpu.core_type<tc>, window_params = [{transform_indices = @transform_0, window_bounds = array<i64: 1, 8, 32>}, {transform_indices = @transform_1, window_bounds = array<i64: 1, 1, 8, 8>}, {pipeline_mode = #tpu.pipeline_mode<synchronous>, transform_indices = @transform_2, window_bounds = array<i64: 1, 32>}, {pipeline_mode = #tpu.pipeline_mode<synchronous>, transform_indices = @transform_3, window_bounds = array<i64: 1, 32>}, {pipeline_mode = #tpu.pipeline_mode<synchronous>, transform_indices = @transform_4, window_bounds = array<i64: 4, 32, 8>}, {pipeline_mode = #tpu.pipeline_mode<synchronous>, transform_indices = @transform_5, window_bounds = array<i64: 4, 1, 8>}, {pipeline_mode = #tpu.pipeline_mode<synchronous>, transform_indices = @transform_6, window_bounds = array<i64: 4, 32, 8>}, {pipeline_mode = #tpu.pipeline_mode<synchronous>, transform_indices = @transform_7, window_bounds = array<i64: 4, 1, 8>}, {pipeline_mode = #tpu.pipeline_mode<synchronous>, transform_indices = @transform_8, window_bounds = array<i64: 4, 32, 8>}, {pipeline_mode = #tpu.pipeline_mode<synchronous>, transform_indices = @transform_9, window_bounds = array<i64: 4, 1, 8>}, {pipeline_mode = #tpu.pipeline_mode<synchronous>, transform_indices = @transform_10, window_bounds = array<i64: 4, 8, 32>}, {pipeline_mode = #tpu.pipeline_mode<synchronous>, transform_indices = @transform_11, window_bounds = array<i64: 1, 32>}, {pipeline_mode = #tpu.pipeline_mode<synchronous>, transform_indices = @transform_12, window_bounds = array<i64: 1, 32>}, {pipeline_mode = #tpu.pipeline_mode<synchronous>, transform_indices = @transform_13, window_bounds = array<i64: 1, 32>}, {pipeline_mode = #tpu.pipeline_mode<synchronous>, transform_indices = @transform_14, window_bounds = array<i64: 32, 64>}, {pipeline_mode = #tpu.pipeline_mode<synchronous>, transform_indices = @transform_15, window_bounds = array<i64: 1, 64>}, {pipeline_mode = #tpu.pipeline_mode<synchronous>, transform_indices = @transform_16, window_bounds = array<i64: 64, 32>}, {pipeline_mode = #tpu.pipeline_mode<synchronous>, transform_indices = @transform_17, window_bounds = array<i64: 1, 32>}, {transform_indices = @transform_18, window_bounds = array<i64: 1, 8, 32>}]} {
    %c0 = arith.constant 0 : index
    %c0_0 = arith.constant 0 : index
    %c0_1 = arith.constant 0 : index
    %0 = vector.load %arg1[%c0, %c0_0, %c0_1] : memref<1x8x32xf32, #tpu.memory_space<vmem>>, vector<1x8x32xf32>
    %1 = vector.shape_cast %0 : vector<1x8x32xf32> to vector<8x32xf32>
    %c0_2 = arith.constant 0 : index
    %c0_3 = arith.constant 0 : index
    %c0_4 = arith.constant 0 : index
    %c0_5 = arith.constant 0 : index
    %2 = vector.load %arg2[%c0_2, %c0_3, %c0_4, %c0_5] : memref<1x1x8x8xf32, #tpu.memory_space<vmem>>, vector<1x1x8x8xf32>
    %3 = vector.shape_cast %2 : vector<1x1x8x8xf32> to vector<8x8xf32>
    %c0_6 = arith.constant 0 : index
    %c0_7 = arith.constant 0 : index
    %4 = vector.load %arg3[%c0_6, %c0_7] : memref<1x32xf32, #tpu.memory_space<vmem>>, vector<1x32xf32>
    %c0_8 = arith.constant 0 : index
    %c0_9 = arith.constant 0 : index
    %5 = vector.load %arg4[%c0_8, %c0_9] : memref<1x32xf32, #tpu.memory_space<vmem>>, vector<1x32xf32>
    %c0_10 = arith.constant 0 : index
    %c0_11 = arith.constant 0 : index
    %c0_12 = arith.constant 0 : index
    %6 = vector.load %arg5[%c0_10, %c0_11, %c0_12] : memref<4x32x8xf32, #tpu.memory_space<vmem>>, vector<4x32x8xf32>
    %c0_13 = arith.constant 0 : index
    %c0_14 = arith.constant 0 : index
    %c0_15 = arith.constant 0 : index
    %7 = vector.load %arg6[%c0_13, %c0_14, %c0_15] : memref<4x1x8xf32, #tpu.memory_space<vmem>>, vector<4x1x8xf32>
    %c0_16 = arith.constant 0 : index
    %c0_17 = arith.constant 0 : index
    %c0_18 = arith.constant 0 : index
    %8 = vector.load %arg7[%c0_16, %c0_17, %c0_18] : memref<4x32x8xf32, #tpu.memory_space<vmem>>, vector<4x32x8xf32>
    %c0_19 = arith.constant 0 : index
    %c0_20 = arith.constant 0 : index
    %c0_21 = arith.constant 0 : index
    %9 = vector.load %arg8[%c0_19, %c0_20, %c0_21] : memref<4x1x8xf32, #tpu.memory_space<vmem>>, vector<4x1x8xf32>
    %c0_22 = arith.constant 0 : index
    %c0_23 = arith.constant 0 : index
    %c0_24 = arith.constant 0 : index
    %10 = vector.load %arg9[%c0_22, %c0_23, %c0_24] : memref<4x32x8xf32, #tpu.memory_space<vmem>>, vector<4x32x8xf32>
    %c0_25 = arith.constant 0 : index
    %c0_26 = arith.constant 0 : index
    %c0_27 = arith.constant 0 : index
    %11 = vector.load %arg10[%c0_25, %c0_26, %c0_27] : memref<4x1x8xf32, #tpu.memory_space<vmem>>, vector<4x1x8xf32>
    %c0_28 = arith.constant 0 : index
    %c0_29 = arith.constant 0 : index
    %c0_30 = arith.constant 0 : index
    %12 = vector.load %arg11[%c0_28, %c0_29, %c0_30] : memref<4x8x32xf32, #tpu.memory_space<vmem>>, vector<4x8x32xf32>
    %c0_31 = arith.constant 0 : index
    %c0_32 = arith.constant 0 : index
    %13 = vector.load %arg12[%c0_31, %c0_32] : memref<1x32xf32, #tpu.memory_space<vmem>>, vector<1x32xf32>
    %c0_33 = arith.constant 0 : index
    %c0_34 = arith.constant 0 : index
    %14 = vector.load %arg13[%c0_33, %c0_34] : memref<1x32xf32, #tpu.memory_space<vmem>>, vector<1x32xf32>
    %c0_35 = arith.constant 0 : index
    %c0_36 = arith.constant 0 : index
    %15 = vector.load %arg14[%c0_35, %c0_36] : memref<1x32xf32, #tpu.memory_space<vmem>>, vector<1x32xf32>
    %c0_37 = arith.constant 0 : index
    %c0_38 = arith.constant 0 : index
    %16 = vector.load %arg15[%c0_37, %c0_38] : memref<32x64xf32, #tpu.memory_space<vmem>>, vector<32x64xf32>
    %c0_39 = arith.constant 0 : index
    %c0_40 = arith.constant 0 : index
    %17 = vector.load %arg16[%c0_39, %c0_40] : memref<1x64xf32, #tpu.memory_space<vmem>>, vector<1x64xf32>
    %c0_41 = arith.constant 0 : index
    %c0_42 = arith.constant 0 : index
    %18 = vector.load %arg17[%c0_41, %c0_42] : memref<64x32xf32, #tpu.memory_space<vmem>>, vector<64x32xf32>
    %c0_43 = arith.constant 0 : index
    %c0_44 = arith.constant 0 : index
    %19 = vector.load %arg18[%c0_43, %c0_44] : memref<1x32xf32, #tpu.memory_space<vmem>>, vector<1x32xf32>
    %cst = arith.constant dense<0.000000e+00> : vector<8xf32>
    %20 = vector.multi_reduction <add>, %1, %cst [1] : vector<8x32xf32> to vector<8xf32>
    %21 = vector.shape_cast %20 : vector<8xf32> to vector<8x1xf32>
    %cst_45 = arith.constant 3.200000e+01 : f32
    %22 = vector.broadcast %cst_45 : f32 to vector<8x1xf32>
    %23 = arith.divf %21, %22 : vector<8x1xf32>
    %24 = vector.broadcast %23 : vector<8x1xf32> to vector<8x32xf32>
    %25 = arith.subf %1, %24 : vector<8x32xf32>
    %26 = arith.mulf %25, %25 : vector<8x32xf32>
    %cst_46 = arith.constant dense<0.000000e+00> : vector<8xf32>
    %27 = vector.multi_reduction <add>, %26, %cst_46 [1] : vector<8x32xf32> to vector<8xf32>
    %28 = vector.shape_cast %27 : vector<8xf32> to vector<8x1xf32>
    %cst_47 = arith.constant 3.200000e+01 : f32
    %29 = vector.broadcast %cst_47 : f32 to vector<8x1xf32>
    %30 = arith.divf %28, %29 : vector<8x1xf32>
    %31 = vector.broadcast %23 : vector<8x1xf32> to vector<8x32xf32>
    %32 = arith.subf %1, %31 : vector<8x32xf32>
    %cst_48 = arith.constant 9.99999997E-7 : f32
    %33 = vector.broadcast %cst_48 : f32 to vector<8x1xf32>
    %34 = arith.addf %30, %33 : vector<8x1xf32>
    %35 = math.rsqrt %34 : vector<8x1xf32>
    %36 = vector.broadcast %35 : vector<8x1xf32> to vector<8x32xf32>
    %37 = arith.mulf %32, %36 : vector<8x32xf32>
    %38 = vector.broadcast %4 : vector<1x32xf32> to vector<8x32xf32>
    %39 = arith.mulf %37, %38 : vector<8x32xf32>
    %40 = vector.broadcast %5 : vector<1x32xf32> to vector<8x32xf32>
    %41 = arith.addf %39, %40 : vector<8x32xf32>
    %42 = vector.shape_cast %41 : vector<8x32xf32> to vector<1x8x32xf32>
    %43 = vector.shape_cast %42 : vector<1x8x32xf32> to vector<1x8x32xf32>
    %44 = vector.broadcast %43 : vector<1x8x32xf32> to vector<4x8x32xf32>
    "tpu.trace_start"() <{level = 10 : i32, message = "hsd,hdf->hsf"}> : () -> ()
    %cst_49 = arith.constant dense<0.000000e+00> : vector<4x8x8xf32>
    %45 = tpu.matmul %44, %6, %cst_49 {dimension_numbers = #tpu.dot_dimension_numbers<[2], [1], [1], [2], [0, 0, 0, 1, 1, 2], [0], [0]>} : vector<4x8x32xf32>, vector<4x32x8xf32>, vector<4x8x8xf32> -> vector<4x8x8xf32>
    "tpu.trace_stop"() : () -> ()
    %46 = vector.broadcast %7 : vector<4x1x8xf32> to vector<4x8x8xf32>
    %47 = arith.addf %45, %46 : vector<4x8x8xf32>
    "tpu.trace_start"() <{level = 10 : i32, message = "hsd,hdf->hsf"}> : () -> ()
    %cst_50 = arith.constant dense<0.000000e+00> : vector<4x8x8xf32>
    %48 = tpu.matmul %44, %8, %cst_50 {dimension_numbers = #tpu.dot_dimension_numbers<[2], [1], [1], [2], [0, 0, 0, 1, 1, 2], [0], [0]>} : vector<4x8x32xf32>, vector<4x32x8xf32>, vector<4x8x8xf32> -> vector<4x8x8xf32>
    "tpu.trace_stop"() : () -> ()
    %49 = vector.broadcast %9 : vector<4x1x8xf32> to vector<4x8x8xf32>
    %50 = arith.addf %48, %49 : vector<4x8x8xf32>
    "tpu.trace_start"() <{level = 10 : i32, message = "hsd,hdf->hsf"}> : () -> ()
    %cst_51 = arith.constant dense<0.000000e+00> : vector<4x8x8xf32>
    %51 = tpu.matmul %44, %10, %cst_51 {dimension_numbers = #tpu.dot_dimension_numbers<[2], [1], [1], [2], [0, 0, 0, 1, 1, 2], [0], [0]>} : vector<4x8x32xf32>, vector<4x32x8xf32>, vector<4x8x8xf32> -> vector<4x8x8xf32>
    "tpu.trace_stop"() : () -> ()
    %52 = vector.broadcast %11 : vector<4x1x8xf32> to vector<4x8x8xf32>
    %53 = arith.addf %51, %52 : vector<4x8x8xf32>
    "tpu.trace_start"() <{level = 10 : i32, message = "hqf,hkf->hqk"}> : () -> ()
    %cst_52 = arith.constant dense<0.000000e+00> : vector<4x8x8xf32>
    %54 = tpu.matmul %47, %50, %cst_52 {dimension_numbers = #tpu.dot_dimension_numbers<[2], [2], [1], [1], [0, 0, 0, 1, 1, 1], [0], [0]>} : vector<4x8x8xf32>, vector<4x8x8xf32>, vector<4x8x8xf32> -> vector<4x8x8xf32>
    "tpu.trace_stop"() : () -> ()
    %cst_53 = arith.constant 0.353553385 : f32
    %55 = vector.broadcast %cst_53 : f32 to vector<4x8x8xf32>
    %56 = arith.mulf %54, %55 : vector<4x8x8xf32>
    %57 = vector.shape_cast %3 : vector<8x8xf32> to vector<1x8x8xf32>
    %58 = vector.broadcast %57 : vector<1x8x8xf32> to vector<4x8x8xf32>
    %59 = arith.addf %56, %58 : vector<4x8x8xf32>
    %cst_54 = arith.constant dense<0xFF800000> : vector<4x8xf32>
    %60 = vector.multi_reduction <maximumf>, %59, %cst_54 [2] : vector<4x8x8xf32> to vector<4x8xf32>
    %61 = vector.shape_cast %60 : vector<4x8xf32> to vector<4x8x1xf32>
    %62 = vector.broadcast %61 : vector<4x8x1xf32> to vector<4x8x8xf32>
    %63 = arith.subf %59, %62 : vector<4x8x8xf32>
    %64 = math.exp %63 : vector<4x8x8xf32>
    %cst_55 = arith.constant dense<0.000000e+00> : vector<4x8xf32>
    %65 = vector.multi_reduction <add>, %64, %cst_55 [2] : vector<4x8x8xf32> to vector<4x8xf32>
    %66 = vector.shape_cast %65 : vector<4x8xf32> to vector<4x8x1xf32>
    %67 = tpu.reciprocal %66 {approx = true} : vector<4x8x1xf32> -> vector<4x8x1xf32>
    %68 = vector.broadcast %67 : vector<4x8x1xf32> to vector<4x8x8xf32>
    %69 = arith.mulf %64, %68 : vector<4x8x8xf32>
    "tpu.trace_start"() <{level = 10 : i32, message = "hqk,hkf->hqf"}> : () -> ()
    %cst_56 = arith.constant dense<0.000000e+00> : vector<4x8x8xf32>
    %70 = tpu.matmul %69, %53, %cst_56 {dimension_numbers = #tpu.dot_dimension_numbers<[2], [1], [1], [2], [0, 0, 0, 1, 1, 2], [0], [0]>} : vector<4x8x8xf32>, vector<4x8x8xf32>, vector<4x8x8xf32> -> vector<4x8x8xf32>
    "tpu.trace_stop"() : () -> ()
    "tpu.trace_start"() <{level = 10 : i32, message = "hsf,hfe->hse"}> : () -> ()
    %cst_57 = arith.constant dense<0.000000e+00> : vector<4x8x32xf32>
    %71 = tpu.matmul %70, %12, %cst_57 {dimension_numbers = #tpu.dot_dimension_numbers<[2], [1], [1], [2], [0, 0, 0, 1, 1, 2], [0], [0]>} : vector<4x8x8xf32>, vector<4x8x32xf32>, vector<4x8x32xf32> -> vector<4x8x32xf32>
    "tpu.trace_stop"() : () -> ()
    %cst_58 = arith.constant dense<0.000000e+00> : vector<8x32xf32>
    %72 = vector.multi_reduction <add>, %71, %cst_58 [0] : vector<4x8x32xf32> to vector<8x32xf32>
    %73 = vector.broadcast %13 : vector<1x32xf32> to vector<8x32xf32>
    %74 = arith.addf %72, %73 : vector<8x32xf32>
    %75 = arith.addf %1, %74 : vector<8x32xf32>
    %cst_59 = arith.constant dense<0.000000e+00> : vector<8xf32>
    %76 = vector.multi_reduction <add>, %75, %cst_59 [1] : vector<8x32xf32> to vector<8xf32>
    %77 = vector.shape_cast %76 : vector<8xf32> to vector<8x1xf32>
    %cst_60 = arith.constant 3.200000e+01 : f32
    %78 = vector.broadcast %cst_60 : f32 to vector<8x1xf32>
    %79 = arith.divf %77, %78 : vector<8x1xf32>
    %80 = vector.broadcast %79 : vector<8x1xf32> to vector<8x32xf32>
    %81 = arith.subf %75, %80 : vector<8x32xf32>
    %82 = arith.mulf %81, %81 : vector<8x32xf32>
    %cst_61 = arith.constant dense<0.000000e+00> : vector<8xf32>
    %83 = vector.multi_reduction <add>, %82, %cst_61 [1] : vector<8x32xf32> to vector<8xf32>
    %84 = vector.shape_cast %83 : vector<8xf32> to vector<8x1xf32>
    %cst_62 = arith.constant 3.200000e+01 : f32
    %85 = vector.broadcast %cst_62 : f32 to vector<8x1xf32>
    %86 = arith.divf %84, %85 : vector<8x1xf32>
    %87 = vector.broadcast %79 : vector<8x1xf32> to vector<8x32xf32>
    %88 = arith.subf %75, %87 : vector<8x32xf32>
    %cst_63 = arith.constant 9.99999997E-7 : f32
    %89 = vector.broadcast %cst_63 : f32 to vector<8x1xf32>
    %90 = arith.addf %86, %89 : vector<8x1xf32>
    %91 = math.rsqrt %90 : vector<8x1xf32>
    %92 = vector.broadcast %91 : vector<8x1xf32> to vector<8x32xf32>
    %93 = arith.mulf %88, %92 : vector<8x32xf32>
    %94 = vector.broadcast %14 : vector<1x32xf32> to vector<8x32xf32>
    %95 = arith.mulf %93, %94 : vector<8x32xf32>
    %96 = vector.broadcast %15 : vector<1x32xf32> to vector<8x32xf32>
    %97 = arith.addf %95, %96 : vector<8x32xf32>
    %cst_64 = arith.constant dense<0.000000e+00> : vector<8x64xf32>
    %98 = tpu.matmul %97, %16, %cst_64 {dimension_numbers = #tpu.dot_dimension_numbers<[1], [0], [0], [1], [0, 0, 1, 1], [], []>} : vector<8x32xf32>, vector<32x64xf32>, vector<8x64xf32> -> vector<8x64xf32>
    %99 = vector.broadcast %17 : vector<1x64xf32> to vector<8x64xf32>
    %100 = arith.addf %98, %99 : vector<8x64xf32>
    %cst_65 = arith.constant 5.000000e-01 : f32
    %101 = vector.broadcast %cst_65 : f32 to vector<8x64xf32>
    %102 = arith.mulf %101, %100 : vector<8x64xf32>
    %cst_66 = arith.constant 4.471500e-02 : f32
    %103 = vector.broadcast %cst_66 : f32 to vector<8x64xf32>
    %104 = arith.mulf %103, %100 : vector<8x64xf32>
    %105 = arith.mulf %104, %100 : vector<8x64xf32>
    %106 = arith.mulf %105, %100 : vector<8x64xf32>
    %107 = arith.addf %100, %106 : vector<8x64xf32>
    %cst_67 = arith.constant 0.797884583 : f32
    %108 = vector.broadcast %cst_67 : f32 to vector<8x64xf32>
    %109 = arith.mulf %108, %107 : vector<8x64xf32>
    %110 = math.tanh %109 : vector<8x64xf32>
    %cst_68 = arith.constant 1.000000e+00 : f32
    %111 = vector.broadcast %cst_68 : f32 to vector<8x64xf32>
    %112 = arith.addf %111, %110 : vector<8x64xf32>
    %113 = arith.mulf %102, %112 : vector<8x64xf32>
    %cst_69 = arith.constant dense<0.000000e+00> : vector<8x32xf32>
    %114 = tpu.matmul %113, %18, %cst_69 {dimension_numbers = #tpu.dot_dimension_numbers<[1], [0], [0], [1], [0, 0, 1, 1], [], []>} : vector<8x64xf32>, vector<64x32xf32>, vector<8x32xf32> -> vector<8x32xf32>
    %115 = vector.broadcast %19 : vector<1x32xf32> to vector<8x32xf32>
    %116 = arith.addf %114, %115 : vector<8x32xf32>
    %117 = arith.addf %75, %116 : vector<8x32xf32>
    %c0_70 = arith.constant 0 : index
    %c0_71 = arith.constant 0 : index
    %c0_72 = arith.constant 0 : index
    %118 = vector.load %arg19[%c0_70, %c0_71, %c0_72] : memref<1x8x32xf32, #tpu.memory_space<vmem>>, vector<1x8x32xf32>
    %119 = vector.shape_cast %118 : vector<1x8x32xf32> to vector<8x32xf32>
    %120 = vector.shape_cast %117 : vector<8x32xf32> to vector<1x8x32xf32>
    tpu.vector_store %arg19[%c0_70, %c0_71, %c0_72], %120 {strides = array<i32>} : memref<1x8x32xf32, #tpu.memory_space<vmem>>, vector<1x8x32xf32>,
    return
  }
  func.func @transform_0(%arg0: i32) -> (i32, i32, i32) {
    %c0_i32 = arith.constant 0 : i32
    %c0_i32_0 = arith.constant 0 : i32
    %c0_i32_1 = arith.constant 0 : i32
    return %arg0, %c0_i32, %c0_i32_0 : i32, i32, i32
  }
  func.func @transform_1(%arg0: i32) -> (i32, i32, i32, i32) {
    %c0_i32 = arith.constant 0 : i32
    %c0_i32_0 = arith.constant 0 : i32
    %c0_i32_1 = arith.constant 0 : i32
    %c0_i32_2 = arith.constant 0 : i32
    return %arg0, %c0_i32, %c0_i32_0, %c0_i32_1 : i32, i32, i32, i32
  }
  func.func @transform_2(%arg0: i32) -> (i32, i32) {
    %c0_i32 = arith.constant 0 : i32
    %c0_i32_0 = arith.constant 0 : i32
    %c0_i32_1 = arith.constant 0 : i32
    return %c0_i32, %c0_i32_0 : i32, i32
  }
  func.func @transform_3(%arg0: i32) -> (i32, i32) {
    %c0_i32 = arith.constant 0 : i32
    %c0_i32_0 = arith.constant 0 : i32
    %c0_i32_1 = arith.constant 0 : i32
    return %c0_i32, %c0_i32_0 : i32, i32
  }
  func.func @transform_4(%arg0: i32) -> (i32, i32, i32) {
    %c0_i32 = arith.constant 0 : i32
    %c0_i32_0 = arith.constant 0 : i32
    %c0_i32_1 = arith.constant 0 : i32
    %c0_i32_2 = arith.constant 0 : i32
    return %c0_i32, %c0_i32_0, %c0_i32_1 : i32, i32, i32
  }
  func.func @transform_5(%arg0: i32) -> (i32, i32, i32) {
    %c0_i32 = arith.constant 0 : i32
    %c0_i32_0 = arith.constant 0 : i32
    %c0_i32_1 = arith.constant 0 : i32
    %c0_i32_2 = arith.constant 0 : i32
    return %c0_i32, %c0_i32_0, %c0_i32_1 : i32, i32, i32
  }
  func.func @transform_6(%arg0: i32) -> (i32, i32, i32) {
    %c0_i32 = arith.constant 0 : i32
    %c0_i32_0 = arith.constant 0 : i32
    %c0_i32_1 = arith.constant 0 : i32
    %c0_i32_2 = arith.constant 0 : i32
    return %c0_i32, %c0_i32_0, %c0_i32_1 : i32, i32, i32
  }
  func.func @transform_7(%arg0: i32) -> (i32, i32, i32) {
    %c0_i32 = arith.constant 0 : i32
    %c0_i32_0 = arith.constant 0 : i32
    %c0_i32_1 = arith.constant 0 : i32
    %c0_i32_2 = arith.constant 0 : i32
    return %c0_i32, %c0_i32_0, %c0_i32_1 : i32, i32, i32
  }
  func.func @transform_8(%arg0: i32) -> (i32, i32, i32) {
    %c0_i32 = arith.constant 0 : i32
    %c0_i32_0 = arith.constant 0 : i32
    %c0_i32_1 = arith.constant 0 : i32
    %c0_i32_2 = arith.constant 0 : i32
    return %c0_i32, %c0_i32_0, %c0_i32_1 : i32, i32, i32
  }
  func.func @transform_9(%arg0: i32) -> (i32, i32, i32) {
    %c0_i32 = arith.constant 0 : i32
    %c0_i32_0 = arith.constant 0 : i32
    %c0_i32_1 = arith.constant 0 : i32
    %c0_i32_2 = arith.constant 0 : i32
    return %c0_i32, %c0_i32_0, %c0_i32_1 : i32, i32, i32
  }
  func.func @transform_10(%arg0: i32) -> (i32, i32, i32) {
    %c0_i32 = arith.constant 0 : i32
    %c0_i32_0 = arith.constant 0 : i32
    %c0_i32_1 = arith.constant 0 : i32
    %c0_i32_2 = arith.constant 0 : i32
    return %c0_i32, %c0_i32_0, %c0_i32_1 : i32, i32, i32
  }
  func.func @transform_11(%arg0: i32) -> (i32, i32) {
    %c0_i32 = arith.constant 0 : i32
    %c0_i32_0 = arith.constant 0 : i32
    %c0_i32_1 = arith.constant 0 : i32
    return %c0_i32, %c0_i32_0 : i32, i32
  }
  func.func @transform_12(%arg0: i32) -> (i32, i32) {
    %c0_i32 = arith.constant 0 : i32
    %c0_i32_0 = arith.constant 0 : i32
    %c0_i32_1 = arith.constant 0 : i32
    return %c0_i32, %c0_i32_0 : i32, i32
  }
  func.func @transform_13(%arg0: i32) -> (i32, i32) {
    %c0_i32 = arith.constant 0 : i32
    %c0_i32_0 = arith.constant 0 : i32
    %c0_i32_1 = arith.constant 0 : i32
    return %c0_i32, %c0_i32_0 : i32, i32
  }
  func.func @transform_14(%arg0: i32) -> (i32, i32) {
    %c0_i32 = arith.constant 0 : i32
    %c0_i32_0 = arith.constant 0 : i32
    %c0_i32_1 = arith.constant 0 : i32
    return %c0_i32, %c0_i32_0 : i32, i32
  }
  func.func @transform_15(%arg0: i32) -> (i32, i32) {
    %c0_i32 = arith.constant 0 : i32
    %c0_i32_0 = arith.constant 0 : i32
    %c0_i32_1 = arith.constant 0 : i32
    return %c0_i32, %c0_i32_0 : i32, i32
  }
  func.func @transform_16(%arg0: i32) -> (i32, i32) {
    %c0_i32 = arith.constant 0 : i32
    %c0_i32_0 = arith.constant 0 : i32
    %c0_i32_1 = arith.constant 0 : i32
    return %c0_i32, %c0_i32_0 : i32, i32
  }
  func.func @transform_17(%arg0: i32) -> (i32, i32) {
    %c0_i32 = arith.constant 0 : i32
    %c0_i32_0 = arith.constant 0 : i32
    %c0_i32_1 = arith.constant 0 : i32
    return %c0_i32, %c0_i32_0 : i32, i32
  }
  func.func @transform_18(%arg0: i32) -> (i32, i32, i32) {
    %c0_i32 = arith.constant 0 : i32
    %c0_i32_0 = arith.constant 0 : i32
    %c0_i32_1 = arith.constant 0 : i32
    return %arg0, %c0_i32, %c0_i32_0 : i32, i32, i32
  }
}

</mosaic_0001>

<llo_original>
// kernel: tpu_custom_call.1
$region0: #{tpu_custom_call.1}
  #allocation0 [shape = 'u32[]', space=smem, size = 0x4, offset = 0x4, fixed_abs, tag = 'smem constant byte address 0x4 - core index']
  #allocation1 [shape = 'u32[72,128]{1,0:T(1,128)}', space=vmem, size = 0x9000, scoped, tag = 'internal scratch']
  %s0 = inlined_call_operand.vmem [shape: f32[2,8,32], index: 0, kind: input, shape index: {}]
  %s1 = inlined_call_operand.vmem [shape: f32[2,1,8,8], index: 1, kind: input, shape index: {}]
  %s2 = inlined_call_operand.vmem [shape: f32[1,32], index: 2, kind: input, shape index: {}]
  %s3 = inlined_call_operand.vmem [shape: f32[1,32], index: 3, kind: input, shape index: {}]
  %s4 = inlined_call_operand.vmem [shape: f32[4,32,8], index: 4, kind: input, shape index: {}]
  %s5 = inlined_call_operand.vmem [shape: f32[4,1,8], index: 5, kind: input, shape index: {}]
  %s6 = inlined_call_operand.vmem [shape: f32[4,32,8], index: 6, kind: input, shape index: {}]
  %s7 = inlined_call_operand.vmem [shape: f32[4,1,8], index: 7, kind: input, shape index: {}]
  %s8 = inlined_call_operand.vmem [shape: f32[4,32,8], index: 8, kind: input, shape index: {}]
  %s9 = inlined_call_operand.vmem [shape: f32[4,1,8], index: 9, kind: input, shape index: {}]
  %s10 = inlined_call_operand.vmem [shape: f32[4,8,32], index: 10, kind: input, shape index: {}]
  %s11 = inlined_call_operand.vmem [shape: f32[1,32], index: 11, kind: input, shape index: {}]
  %s12 = inlined_call_operand.vmem [shape: f32[1,32], index: 12, kind: input, shape index: {}]
  %s13 = inlined_call_operand.vmem [shape: f32[1,32], index: 13, kind: input, shape index: {}]
  %s14 = inlined_call_operand.vmem [shape: f32[32,64], index: 14, kind: input, shape index: {}]
  %s15 = inlined_call_operand.vmem [shape: f32[1,64], index: 15, kind: input, shape index: {}]
  %s16 = inlined_call_operand.vmem [shape: f32[64,32], index: 16, kind: input, shape index: {}]
  %s17 = inlined_call_operand.vmem [shape: f32[1,32], index: 17, kind: input, shape index: {}]
  %s18 = inlined_call_operand.hbm [shape: f32[2,8,32], index: 18, kind: output, shape index: {}]
  %s19 = sld [smem:[#allocation0]]
  $region105: #{tpu_custom_call.1} parent=0
    _
  %s21 = ssub.s32 1, %s19
  %s22 = scalar_select 0, %s21, %s19
  $region1: #{tpu_custom_call.1} parent=0
    #allocation2 [shape = 'u8[8192]{0}', space=vmem, size = 0x2000, scoped, tag = 'output window, operand 0']
    #allocation3 [shape = 's32[2]{0}', space=sflag, size = 0x8, scoped, tag = 'scoped memory for tpu_custom_call.1']
    %23 = vsyncpa [#allocation3], 0
    %s24 = scalar_lea.sflag [#allocation3], 1
    %25 = vsyncpa %s24, 0
    loop: start=0, step=1, limit=4
    $region2: #{tpu_custom_call.1} parent=1 // loop_pre_header
      _
    $region3: #{tpu_custom_call.1} parent=1 // loop_header
      %s27 = sphi 0, %s31
      %p28 = scmp.ge.s32.totalorder %s27, 4
      %s37 = sphi 0, %s39
      %s40 = sphi 0, %s37
      %s41 = sphi 0, %s40
      %s57 = sphi 0, %s41
      %s63 = sphi 0, %s65
      %s66 = sphi 0, %s63
      %s67 = sphi 0, %s66
      %s83 = sphi 0, %s67
      %s87 = sphi 0, %s87
      %s89 = sphi 0, %s87
      %s90 = sphi 0, %s89
      %s104 = sphi 0, %s90
      %s108 = sphi 0, %s108
      %s110 = sphi 0, %s108
      %s111 = sphi 0, %s110
      %s125 = sphi 0, %s111
      %s129 = sphi 0, %s129
      %s131 = sphi 0, %s129
      %s132 = sphi 0, %s131
      %s146 = sphi 0, %s132
      %s150 = sphi 0, %s150
      %s152 = sphi 0, %s150
      %s153 = sphi 0, %s152
      %s167 = sphi 0, %s153
      %s171 = sphi 0, %s171
      %s173 = sphi 0, %s171
      %s174 = sphi 0, %s173
      %s188 = sphi 0, %s174
      %s192 = sphi 0, %s192
      %s194 = sphi 0, %s192
      %s195 = sphi 0, %s194
      %s209 = sphi 0, %s195
      %s213 = sphi 0, %s213
      %s215 = sphi 0, %s213
      %s216 = sphi 0, %s215
      %s230 = sphi 0, %s216
      %s234 = sphi 0, %s234
      %s236 = sphi 0, %s234
      %s237 = sphi 0, %s236
      %s251 = sphi 0, %s237
      %s255 = sphi 0, %s255
      %s257 = sphi 0, %s255
      %s258 = sphi 0, %s257
      %s272 = sphi 0, %s258
      %s276 = sphi 0, %s276
      %s278 = sphi 0, %s276
      %s279 = sphi 0, %s278
      %s293 = sphi 0, %s279
      %s297 = sphi 0, %s297
      %s299 = sphi 0, %s297
      %s300 = sphi 0, %s299
      %s314 = sphi 0, %s300
      %s318 = sphi 0, %s318
      %s320 = sphi 0, %s318
      %s321 = sphi 0, %s320
      %s335 = sphi 0, %s321
      %s339 = sphi 0, %s339
      %s341 = sphi 0, %s339
      %s342 = sphi 0, %s341
      %s356 = sphi 0, %s342
      %s360 = sphi 0, %s360
      %s362 = sphi 0, %s360
      %s363 = sphi 0, %s362
      %s377 = sphi 0, %s363
      %s381 = sphi 0, %s381
      %s383 = sphi 0, %s381
      %s384 = sphi 0, %s383
      %s398 = sphi 0, %s384
      %s402 = sphi 0, %s402
      %s404 = sphi 0, %s402
      %s405 = sphi 0, %s404
      %s419 = sphi 0, %s405
      %s425 = sphi 0, %s427
      %s428 = sphi 0, %s425
      %s429 = sphi 0, %s428
      %s445 = sphi 0, %s429
    $region4: #{tpu_custom_call.1} parent=1 // loop_header_branch
      %30 = sbr.rel (%p28) target = $region8
    $region5: #{tpu_custom_call.1} parent=1 // loop_body
      %s32 = ssub.s32 %s27, 1
      %s33 = ssub.s32 %s27, 2
      %s34 = sadd.s32 %s27, 1
      %s35 = ssub.s32 %s27, %s34
      %p36 = scmp.eq.s32.totalorder %s35, 0
      %s38 = sadd.s32 %s37, 1
      %s39 = scalar_select %p36, %s37, %s38
      %p42 = pneg %p36
      %p43 = scmp.eq.s32.totalorder %s27, 1
      %p44 = por %p42, %p43
      %p45 = scmp.ne.s32.totalorder %s37, %s40
      %p46 = scmp.eq.s32.totalorder %s27, 0
      %p47 = por %p45, %p46
      %p48 = scmp.ne.s32.totalorder %s37, %s40
      %p49 = scmp.eq.s32.totalorder %s32, 1
      %p50 = por %p48, %p49
      %p51 = scmp.ne.s32.totalorder %s40, %s41
      %p52 = scmp.eq.s32.totalorder %s32, 0
      %p53 = por %p51, %p52
      %p54 = scmp.ne.s32.totalorder %s40, %s41
      %p55 = scmp.eq.s32.totalorder %s33, 1
      %p56 = por %p54, %p55
      %p58 = scmp.ne.s32.totalorder %s41, %s57
      %p59 = scmp.eq.s32.totalorder %s33, 0
      %p60 = por %p58, %p59
      %s61 = ssub.s32 %s27, %s34
      %p62 = scmp.eq.s32.totalorder %s61, 0
      %s64 = sadd.s32 %s63, 1
      %s65 = scalar_select %p62, %s63, %s64
      %p68 = pneg %p62
      %p69 = scmp.eq.s32.totalorder %s27, 1
      %p70 = por %p68, %p69
      %p71 = scmp.ne.s32.totalorder %s63, %s66
      %p72 = scmp.eq.s32.totalorder %s27, 0
      %p73 = por %p71, %p72
      %p74 = scmp.ne.s32.totalorder %s63, %s66
      %p75 = scmp.eq.s32.totalorder %s32, 1
      %p76 = por %p74, %p75
      %p77 = scmp.ne.s32.totalorder %s66, %s67
      %p78 = scmp.eq.s32.totalorder %s32, 0
      %p79 = por %p77, %p78
      %p80 = scmp.ne.s32.totalorder %s66, %s67
      %p81 = scmp.eq.s32.totalorder %s33, 1
      %p82 = por %p80, %p81
      %p84 = scmp.ne.s32.totalorder %s67, %s83
      %p85 = scmp.eq.s32.totalorder %s33, 0
      %p86 = por %p84, %p85
      %s88 = sadd.s32 %s87, 1
      %p91 = scmp.eq.s32.totalorder %s27, 1
      %p92 = scmp.ne.s32.totalorder %s87, %s89
      %p93 = scmp.eq.s32.totalorder %s27, 0
      %p94 = por %p92, %p93
      %p95 = scmp.ne.s32.totalorder %s87, %s89
      %p96 = scmp.eq.s32.totalorder %s32, 1
      %p97 = por %p95, %p96
      %p98 = scmp.ne.s32.totalorder %s89, %s90
      %p99 = scmp.eq.s32.totalorder %s32, 0
      %p100 = por %p98, %p99
      %p101 = scmp.ne.s32.totalorder %s89, %s90
      %p102 = scmp.eq.s32.totalorder %s33, 1
      %p103 = por %p101, %p102
      %p105 = scmp.ne.s32.totalorder %s90, %s104
      %p106 = scmp.eq.s32.totalorder %s33, 0
      %p107 = por %p105, %p106
      %s109 = sadd.s32 %s108, 1
      %p112 = scmp.eq.s32.totalorder %s27, 1
      %p113 = scmp.ne.s32.totalorder %s108, %s110
      %p114 = scmp.eq.s32.totalorder %s27, 0
      %p115 = por %p113, %p114
      %p116 = scmp.ne.s32.totalorder %s108, %s110
      %p117 = scmp.eq.s32.totalorder %s32, 1
      %p118 = por %p116, %p117
      %p119 = scmp.ne.s32.totalorder %s110, %s111
      %p120 = scmp.eq.s32.totalorder %s32, 0
      %p121 = por %p119, %p120
      %p122 = scmp.ne.s32.totalorder %s110, %s111
      %p123 = scmp.eq.s32.totalorder %s33, 1
      %p124 = por %p122, %p123
      %p126 = scmp.ne.s32.totalorder %s111, %s125
      %p127 = scmp.eq.s32.totalorder %s33, 0
      %p128 = por %p126, %p127
      %s130 = sadd.s32 %s129, 1
      %p133 = scmp.eq.s32.totalorder %s27, 1
      %p134 = scmp.ne.s32.totalorder %s129, %s131
      %p135 = scmp.eq.s32.totalorder %s27, 0
      %p136 = por %p134, %p135
      %p137 = scmp.ne.s32.totalorder %s129, %s131
      %p138 = scmp.eq.s32.totalorder %s32, 1
      %p139 = por %p137, %p138
      %p140 = scmp.ne.s32.totalorder %s131, %s132
      %p141 = scmp.eq.s32.totalorder %s32, 0
      %p142 = por %p140, %p141
      %p143 = scmp.ne.s32.totalorder %s131, %s132
      %p144 = scmp.eq.s32.totalorder %s33, 1
      %p145 = por %p143, %p144
      %p147 = scmp.ne.s32.totalorder %s132, %s146
      %p148 = scmp.eq.s32.totalorder %s33, 0
      %p149 = por %p147, %p148
      %s151 = sadd.s32 %s150, 1
      %p154 = scmp.eq.s32.totalorder %s27, 1
      %p155 = scmp.ne.s32.totalorder %s150, %s152
      %p156 = scmp.eq.s32.totalorder %s27, 0
      %p157 = por %p155, %p156
      %p158 = scmp.ne.s32.totalorder %s150, %s152
      %p159 = scmp.eq.s32.totalorder %s32, 1
      %p160 = por %p158, %p159
      %p161 = scmp.ne.s32.totalorder %s152, %s153
      %p162 = scmp.eq.s32.totalorder %s32, 0
      %p163 = por %p161, %p162
      %p164 = scmp.ne.s32.totalorder %s152, %s153
      %p165 = scmp.eq.s32.totalorder %s33, 1
      %p166 = por %p164, %p165
      %p168 = scmp.ne.s32.totalorder %s153, %s167
      %p169 = scmp.eq.s32.totalorder %s33, 0
      %p170 = por %p168, %p169
      %s172 = sadd.s32 %s171, 1
      %p175 = scmp.eq.s32.totalorder %s27, 1
      %p176 = scmp.ne.s32.totalorder %s171, %s173
      %p177 = scmp.eq.s32.totalorder %s27, 0
      %p178 = por %p176, %p177
      %p179 = scmp.ne.s32.totalorder %s171, %s173
      %p180 = scmp.eq.s32.totalorder %s32, 1
      %p181 = por %p179, %p180
      %p182 = scmp.ne.s32.totalorder %s173, %s174
      %p183 = scmp.eq.s32.totalorder %s32, 0
      %p184 = por %p182, %p183
      %p185 = scmp.ne.s32.totalorder %s173, %s174
      %p186 = scmp.eq.s32.totalorder %s33, 1
      %p187 = por %p185, %p186
      %p189 = scmp.ne.s32.totalorder %s174, %s188
      %p190 = scmp.eq.s32.totalorder %s33, 0
      %p191 = por %p189, %p190
      %s193 = sadd.s32 %s192, 1
      %p196 = scmp.eq.s32.totalorder %s27, 1
      %p197 = scmp.ne.s32.totalorder %s192, %s194
      %p198 = scmp.eq.s32.totalorder %s27, 0
      %p199 = por %p197, %p198
      %p200 = scmp.ne.s32.totalorder %s192, %s194
      %p201 = scmp.eq.s32.totalorder %s32, 1
      %p202 = por %p200, %p201
      %p203 = scmp.ne.s32.totalorder %s194, %s195
      %p204 = scmp.eq.s32.totalorder %s32, 0
      %p205 = por %p203, %p204
      %p206 = scmp.ne.s32.totalorder %s194, %s195
      %p207 = scmp.eq.s32.totalorder %s33, 1
      %p208 = por %p206, %p207
      %p210 = scmp.ne.s32.totalorder %s195, %s209
      %p211 = scmp.eq.s32.totalorder %s33, 0
      %p212 = por %p210, %p211
      %s214 = sadd.s32 %s213, 1
      %p217 = scmp.eq.s32.totalorder %s27, 1
      %p218 = scmp.ne.s32.totalorder %s213, %s215
      %p219 = scmp.eq.s32.totalorder %s27, 0
      %p220 = por %p218, %p219
      %p221 = scmp.ne.s32.totalorder %s213, %s215
      %p222 = scmp.eq.s32.totalorder %s32, 1
      %p223 = por %p221, %p222
      %p224 = scmp.ne.s32.totalorder %s215, %s216
      %p225 = scmp.eq.s32.totalorder %s32, 0
      %p226 = por %p224, %p225
      %p227 = scmp.ne.s32.totalorder %s215, %s216
      %p228 = scmp.eq.s32.totalorder %s33, 1
      %p229 = por %p227, %p228
      %p231 = scmp.ne.s32.totalorder %s216, %s230
      %p232 = scmp.eq.s32.totalorder %s33, 0
      %p233 = por %p231, %p232
      %s235 = sadd.s32 %s234, 1
      %p238 = scmp.eq.s32.totalorder %s27, 1
      %p239 = scmp.ne.s32.totalorder %s234, %s236
      %p240 = scmp.eq.s32.totalorder %s27, 0
      %p241 = por %p239, %p240
      %p242 = scmp.ne.s32.totalorder %s234, %s236
      %p243 = scmp.eq.s32.totalorder %s32, 1
      %p244 = por %p242, %p243
      %p245 = scmp.ne.s32.totalorder %s236, %s237
      %p246 = scmp.eq.s32.totalorder %s32, 0
      %p247 = por %p245, %p246
      %p248 = scmp.ne.s32.totalorder %s236, %s237
      %p249 = scmp.eq.s32.totalorder %s33, 1
      %p250 = por %p248, %p249
      %p252 = scmp.ne.s32.totalorder %s237, %s251
      %p253 = scmp.eq.s32.totalorder %s33, 0
      %p254 = por %p252, %p253
      %s256 = sadd.s32 %s255, 1
      %p259 = scmp.eq.s32.totalorder %s27, 1
      %p260 = scmp.ne.s32.totalorder %s255, %s257
      %p261 = scmp.eq.s32.totalorder %s27, 0
      %p262 = por %p260, %p261
      %p263 = scmp.ne.s32.totalorder %s255, %s257
      %p264 = scmp.eq.s32.totalorder %s32, 1
      %p265 = por %p263, %p264
      %p266 = scmp.ne.s32.totalorder %s257, %s258
      %p267 = scmp.eq.s32.totalorder %s32, 0
      %p268 = por %p266, %p267
      %p269 = scmp.ne.s32.totalorder %s257, %s258
      %p270 = scmp.eq.s32.totalorder %s33, 1
      %p271 = por %p269, %p270
      %p273 = scmp.ne.s32.totalorder %s258, %s272
      %p274 = scmp.eq.s32.totalorder %s33, 0
      %p275 = por %p273, %p274
      %s277 = sadd.s32 %s276, 1
      %p280 = scmp.eq.s32.totalorder %s27, 1
      %p281 = scmp.ne.s32.totalorder %s276, %s278
      %p282 = scmp.eq.s32.totalorder %s27, 0
      %p283 = por %p281, %p282
      %p284 = scmp.ne.s32.totalorder %s276, %s278
      %p285 = scmp.eq.s32.totalorder %s32, 1
      %p286 = por %p284, %p285
      %p287 = scmp.ne.s32.totalorder %s278, %s279
      %p288 = scmp.eq.s32.totalorder %s32, 0
      %p289 = por %p287, %p288
      %p290 = scmp.ne.s32.totalorder %s278, %s279
      %p291 = scmp.eq.s32.totalorder %s33, 1
      %p292 = por %p290, %p291
      %p294 = scmp.ne.s32.totalorder %s279, %s293
      %p295 = scmp.eq.s32.totalorder %s33, 0
      %p296 = por %p294, %p295
      %s298 = sadd.s32 %s297, 1
      %p301 = scmp.eq.s32.totalorder %s27, 1
      %p302 = scmp.ne.s32.totalorder %s297, %s299
      %p303 = scmp.eq.s32.totalorder %s27, 0
      %p304 = por %p302, %p303
      %p305 = scmp.ne.s32.totalorder %s297, %s299
      %p306 = scmp.eq.s32.totalorder %s32, 1
      %p307 = por %p305, %p306
      %p308 = scmp.ne.s32.totalorder %s299, %s300
      %p309 = scmp.eq.s32.totalorder %s32, 0
      %p310 = por %p308, %p309
      %p311 = scmp.ne.s32.totalorder %s299, %s300
      %p312 = scmp.eq.s32.totalorder %s33, 1
      %p313 = por %p311, %p312
      %p315 = scmp.ne.s32.totalorder %s300, %s314
      %p316 = scmp.eq.s32.totalorder %s33, 0
      %p317 = por %p315, %p316
      %s319 = sadd.s32 %s318, 1
      %p322 = scmp.eq.s32.totalorder %s27, 1
      %p323 = scmp.ne.s32.totalorder %s318, %s320
      %p324 = scmp.eq.s32.totalorder %s27, 0
      %p325 = por %p323, %p324
      %p326 = scmp.ne.s32.totalorder %s318, %s320
      %p327 = scmp.eq.s32.totalorder %s32, 1
      %p328 = por %p326, %p327
      %p329 = scmp.ne.s32.totalorder %s320, %s321
      %p330 = scmp.eq.s32.totalorder %s32, 0
      %p331 = por %p329, %p330
      %p332 = scmp.ne.s32.totalorder %s320, %s321
      %p333 = scmp.eq.s32.totalorder %s33, 1
      %p334 = por %p332, %p333
      %p336 = scmp.ne.s32.totalorder %s321, %s335
      %p337 = scmp.eq.s32.totalorder %s33, 0
      %p338 = por %p336, %p337
      %s340 = sadd.s32 %s339, 1
      %p343 = scmp.eq.s32.totalorder %s27, 1
      %p344 = scmp.ne.s32.totalorder %s339, %s341
      %p345 = scmp.eq.s32.totalorder %s27, 0
      %p346 = por %p344, %p345
      %p347 = scmp.ne.s32.totalorder %s339, %s341
      %p348 = scmp.eq.s32.totalorder %s32, 1
      %p349 = por %p347, %p348
      %p350 = scmp.ne.s32.totalorder %s341, %s342
      %p351 = scmp.eq.s32.totalorder %s32, 0
      %p352 = por %p350, %p351
      %p353 = scmp.ne.s32.totalorder %s341, %s342
      %p354 = scmp.eq.s32.totalorder %s33, 1
      %p355 = por %p353, %p354
      %p357 = scmp.ne.s32.totalorder %s342, %s356
      %p358 = scmp.eq.s32.totalorder %s33, 0
      %p359 = por %p357, %p358
      %s361 = sadd.s32 %s360, 1
      %p364 = scmp.eq.s32.totalorder %s27, 1
      %p365 = scmp.ne.s32.totalorder %s360, %s362
      %p366 = scmp.eq.s32.totalorder %s27, 0
      %p367 = por %p365, %p366
      %p368 = scmp.ne.s32.totalorder %s360, %s362
      %p369 = scmp.eq.s32.totalorder %s32, 1
      %p370 = por %p368, %p369
      %p371 = scmp.ne.s32.totalorder %s362, %s363
      %p372 = scmp.eq.s32.totalorder %s32, 0
      %p373 = por %p371, %p372
      %p374 = scmp.ne.s32.totalorder %s362, %s363
      %p375 = scmp.eq.s32.totalorder %s33, 1
      %p376 = por %p374, %p375
      %p378 = scmp.ne.s32.totalorder %s363, %s377
      %p379 = scmp.eq.s32.totalorder %s33, 0
      %p380 = por %p378, %p379
      %s382 = sadd.s32 %s381, 1
      %p385 = scmp.eq.s32.totalorder %s27, 1
      %p386 = scmp.ne.s32.totalorder %s381, %s383
      %p387 = scmp.eq.s32.totalorder %s27, 0
      %p388 = por %p386, %p387
      %p389 = scmp.ne.s32.totalorder %s381, %s383
      %p390 = scmp.eq.s32.totalorder %s32, 1
      %p391 = por %p389, %p390
      %p392 = scmp.ne.s32.totalorder %s383, %s384
      %p393 = scmp.eq.s32.totalorder %s32, 0
      %p394 = por %p392, %p393
      %p395 = scmp.ne.s32.totalorder %s383, %s384
      %p396 = scmp.eq.s32.totalorder %s33, 1
      %p397 = por %p395, %p396
      %p399 = scmp.ne.s32.totalorder %s384, %s398
      %p400 = scmp.eq.s32.totalorder %s33, 0
      %p401 = por %p399, %p400
      %s403 = sadd.s32 %s402, 1
      %p406 = scmp.eq.s32.totalorder %s27, 1
      %p407 = scmp.ne.s32.totalorder %s402, %s404
      %p408 = scmp.eq.s32.totalorder %s27, 0
      %p409 = por %p407, %p408
      %p410 = scmp.ne.s32.totalorder %s402, %s404
      %p411 = scmp.eq.s32.totalorder %s32, 1
      %p412 = por %p410, %p411
      %p413 = scmp.ne.s32.totalorder %s404, %s405
      %p414 = scmp.eq.s32.totalorder %s32, 0
      %p415 = por %p413, %p414
      %p416 = scmp.ne.s32.totalorder %s404, %s405
      %p417 = scmp.eq.s32.totalorder %s33, 1
      %p418 = por %p416, %p417
      %p420 = scmp.ne.s32.totalorder %s405, %s419
      %p421 = scmp.eq.s32.totalorder %s33, 0
      %p422 = por %p420, %p421
      %s423 = ssub.s32 %s27, %s34
      %p424 = scmp.eq.s32.totalorder %s423, 0
      %s426 = sadd.s32 %s425, 1
      %s427 = scalar_select %p424, %s425, %s426
      %p430 = pneg %p424
      %p431 = scmp.eq.s32.totalorder %s27, 1
      %p432 = por %p430, %p431
      %p433 = scmp.ne.s32.totalorder %s425, %s428
      %p434 = scmp.eq.s32.totalorder %s27, 0
      %p435 = por %p433, %p434
      %p436 = scmp.ne.s32.totalorder %s425, %s428
      %p437 = scmp.eq.s32.totalorder %s32, 1
      %p438 = por %p436, %p437
      %p439 = scmp.ne.s32.totalorder %s428, %s429
      %p440 = scmp.eq.s32.totalorder %s32, 0
      %p441 = por %p439, %p440
      %p442 = scmp.ne.s32.totalorder %s428, %s429
      %p443 = scmp.eq.s32.totalorder %s33, 1
      %p444 = por %p442, %p443
      %p446 = scmp.ne.s32.totalorder %s429, %s445
      %p447 = scmp.eq.s32.totalorder %s33, 0
      %p448 = por %p446, %p447
      %p449 = scmp.le.s32.totalorder 1, %s27
      %p450 = scmp.lt.s32.totalorder %s27, 3
      %p451 = pnand %p449, %p450
      %p452 = pneg %p451
      // Predicated region
      $region9: #{tpu_custom_call.1} parent=5 // pred_check
        _
      $region10: #{tpu_custom_call.1} parent=5 // pred_check_branch
        %454 = sbr.rel (%p451) target = $region12
      $region11: #{tpu_custom_call.1} parent=5 // pred_region
        %s455 = ssub.s32 %s27, 1
        // Predicated region
        $region13: #{tpu_custom_call.1} parent=11 // pred_check
          %p456 = pneg %p100
        $region14: #{tpu_custom_call.1} parent=11 // pred_check_branch
          %458 = sbr.rel (%p456) target = $region16
        $region15: #{tpu_custom_call.1} parent=11 // pred_region
          _
        $region16: #{tpu_custom_call.1} parent=11 // pred_fallthru
          _
        // Predicated region
        $region17: #{tpu_custom_call.1} parent=11 // pred_check
          %p459 = pneg %p121
        $region18: #{tpu_custom_call.1} parent=11 // pred_check_branch
          %461 = sbr.rel (%p459) target = $region20
        $region19: #{tpu_custom_call.1} parent=11 // pred_region
          _
        $region20: #{tpu_custom_call.1} parent=11 // pred_fallthru
          _
        // Predicated region
        $region21: #{tpu_custom_call.1} parent=11 // pred_check
          %p462 = pneg %p142
        $region22: #{tpu_custom_call.1} parent=11 // pred_check_branch
          %464 = sbr.rel (%p462) target = $region24
        $region23: #{tpu_custom_call.1} parent=11 // pred_region
          _
        $region24: #{tpu_custom_call.1} parent=11 // pred_fallthru
          _
        // Predicated region
        $region25: #{tpu_custom_call.1} parent=11 // pred_check
          %p465 = pneg %p163
        $region26: #{tpu_custom_call.1} parent=11 // pred_check_branch
          %467 = sbr.rel (%p465) target = $region28
        $region27: #{tpu_custom_call.1} parent=11 // pred_region
          _
        $region28: #{tpu_custom_call.1} parent=11 // pred_fallthru
          _
        // Predicated region
        $region29: #{tpu_custom_call.1} parent=11 // pred_check
          %p468 = pneg %p184
        $region30: #{tpu_custom_call.1} parent=11 // pred_check_branch
          %470 = sbr.rel (%p468) target = $region32
        $region31: #{tpu_custom_call.1} parent=11 // pred_region
          _
        $region32: #{tpu_custom_call.1} parent=11 // pred_fallthru
          _
        // Predicated region
        $region33: #{tpu_custom_call.1} parent=11 // pred_check
          %p471 = pneg %p205
        $region34: #{tpu_custom_call.1} parent=11 // pred_check_branch
          %473 = sbr.rel (%p471) target = $region36
        $region35: #{tpu_custom_call.1} parent=11 // pred_region
          _
        $region36: #{tpu_custom_call.1} parent=11 // pred_fallthru
          _
        // Predicated region
        $region37: #{tpu_custom_call.1} parent=11 // pred_check
          %p474 = pneg %p226
        $region38: #{tpu_custom_call.1} parent=11 // pred_check_branch
          %476 = sbr.rel (%p474) target = $region40
        $region39: #{tpu_custom_call.1} parent=11 // pred_region
          _
        $region40: #{tpu_custom_call.1} parent=11 // pred_fallthru
          _
        // Predicated region
        $region41: #{tpu_custom_call.1} parent=11 // pred_check
          %p477 = pneg %p247
        $region42: #{tpu_custom_call.1} parent=11 // pred_check_branch
          %479 = sbr.rel (%p477) target = $region44
        $region43: #{tpu_custom_call.1} parent=11 // pred_region
          _
        $region44: #{tpu_custom_call.1} parent=11 // pred_fallthru
          _
        // Predicated region
        $region45: #{tpu_custom_call.1} parent=11 // pred_check
          %p480 = pneg %p268
        $region46: #{tpu_custom_call.1} parent=11 // pred_check_branch
          %482 = sbr.rel (%p480) target = $region48
        $region47: #{tpu_custom_call.1} parent=11 // pred_region
          _
        $region48: #{tpu_custom_call.1} parent=11 // pred_fallthru
          _
        // Predicated region
        $region49: #{tpu_custom_call.1} parent=11 // pred_check
          %p483 = pneg %p289
        $region50: #{tpu_custom_call.1} parent=11 // pred_check_branch
          %485 = sbr.rel (%p483) target = $region52
        $region51: #{tpu_custom_call.1} parent=11 // pred_region
          _
        $region52: #{tpu_custom_call.1} parent=11 // pred_fallthru
          _
        // Predicated region
        $region53: #{tpu_custom_call.1} parent=11 // pred_check
          %p486 = pneg %p310
        $region54: #{tpu_custom_call.1} parent=11 // pred_check_branch
          %488 = sbr.rel (%p486) target = $region56
        $region55: #{tpu_custom_call.1} parent=11 // pred_region
          _
        $region56: #{tpu_custom_call.1} parent=11 // pred_fallthru
          _
        // Predicated region
        $region57: #{tpu_custom_call.1} parent=11 // pred_check
          %p489 = pneg %p331
        $region58: #{tpu_custom_call.1} parent=11 // pred_check_branch
          %491 = sbr.rel (%p489) target = $region60
        $region59: #{tpu_custom_call.1} parent=11 // pred_region
          _
        $region60: #{tpu_custom_call.1} parent=11 // pred_fallthru
          _
        // Predicated region
        $region61: #{tpu_custom_call.1} parent=11 // pred_check
          %p492 = pneg %p352
        $region62: #{tpu_custom_call.1} parent=11 // pred_check_branch
          %494 = sbr.rel (%p492) target = $region64
        $region63: #{tpu_custom_call.1} parent=11 // pred_region
          _
        $region64: #{tpu_custom_call.1} parent=11 // pred_fallthru
          _
        // Predicated region
        $region65: #{tpu_custom_call.1} parent=11 // pred_check
          %p495 = pneg %p373
        $region66: #{tpu_custom_call.1} parent=11 // pred_check_branch
          %497 = sbr.rel (%p495) target = $region68
        $region67: #{tpu_custom_call.1} parent=11 // pred_region
          _
        $region68: #{tpu_custom_call.1} parent=11 // pred_fallthru
          _
        // Predicated region
        $region69: #{tpu_custom_call.1} parent=11 // pred_check
          %p498 = pneg %p394
        $region70: #{tpu_custom_call.1} parent=11 // pred_check_branch
          %500 = sbr.rel (%p498) target = $region72
        $region71: #{tpu_custom_call.1} parent=11 // pred_region
          _
        $region72: #{tpu_custom_call.1} parent=11 // pred_fallthru
          _
        // Predicated region
        $region73: #{tpu_custom_call.1} parent=11 // pred_check
          %p501 = pneg %p415
        $region74: #{tpu_custom_call.1} parent=11 // pred_check_branch
          %503 = sbr.rel (%p501) target = $region76
        $region75: #{tpu_custom_call.1} parent=11 // pred_region
          _
        $region76: #{tpu_custom_call.1} parent=11 // pred_fallthru
          _
      $region12: #{tpu_custom_call.1} parent=5 // pred_fallthru
        _
      %p504 = scmp.lt.s32.totalorder %s27, 2
      // Predicated region
      $region77: #{tpu_custom_call.1} parent=5 // pred_check
        %p505 = pneg %p504
      $region78: #{tpu_custom_call.1} parent=5 // pred_check_branch
        %507 = sbr.rel (%p505) target = $region80
      $region79: #{tpu_custom_call.1} parent=5 // pred_region
        // Predicated region
        $region81: #{tpu_custom_call.1} parent=79 // pred_check
          %p508 = pneg %p47
        $region82: #{tpu_custom_call.1} parent=79 // pred_check_branch
          %510 = sbr.rel (%p508) target = $region84
        $region83: #{tpu_custom_call.1} parent=79 // pred_region
          %p511 = scmp.lt.s32.totalorder %s27, 1
          %s512 = scalar_select %p511, %s27, 1
          %s513 = smul.addr %s512, 8
          %s514 = scalar_lea.vmem %s0, %s513
        $region84: #{tpu_custom_call.1} parent=79 // pred_fallthru
          _
        // Predicated region
        $region85: #{tpu_custom_call.1} parent=79 // pred_check
          %p515 = pneg %p73
        $region86: #{tpu_custom_call.1} parent=79 // pred_check_branch
          %517 = sbr.rel (%p515) target = $region88
        $region87: #{tpu_custom_call.1} parent=79 // pred_region
          %p518 = scmp.lt.s32.totalorder %s27, 1
          %s519 = scalar_select %p518, %s27, 1
          %s520 = smul.addr %s519, 8
          %s521 = scalar_lea.vmem %s1, %s520
        $region88: #{tpu_custom_call.1} parent=79 // pred_fallthru
          _
      $region80: #{tpu_custom_call.1} parent=5 // pred_fallthru
        _
      %p522 = scmp.le.s32.totalorder 1, %s27
      %p523 = scmp.lt.s32.totalorder %s27, 3
      %p524 = pnand %p522, %p523
      %p525 = pneg %p524
      // Predicated region
      $region89: #{tpu_custom_call.1} parent=5 // pred_check
        _
      $region90: #{tpu_custom_call.1} parent=5 // pred_check_branch
        %527 = sbr.rel (%p524) target = $region92
      $region91: #{tpu_custom_call.1} parent=5 // pred_region
        %s528 = ssub.s32 %s27, 1
        %p529 = scmp.lt.s32.totalorder %s32, 1
        %s530 = scalar_select %p529, %s32, 1
        %s531 = smul.addr %s530, 8
        %s532 = scalar_lea.vmem %s0, %s531
        %p533 = pneg %p53
        %p534 = pneg %p50
        %p535 = scmp.lt.s32.totalorder %s32, 1
        %s536 = scalar_select %p535, %s32, 1
        %s537 = smul.addr %s536, 8
        %s538 = scalar_lea.vmem %s1, %s537
        %p539 = pneg %p79
        %p540 = pneg %p76
        %p541 = pneg %p100
        %p542 = pneg %p97
        %p543 = pneg %p121
        %p544 = pneg %p118
        %p545 = pneg %p142
        %p546 = pneg %p139
        %p547 = pneg %p163
        %p548 = pneg %p160
        %p549 = pneg %p184
        %p550 = pneg %p181
        %p551 = pneg %p205
        %p552 = pneg %p202
        %p553 = pneg %p226
        %p554 = pneg %p223
        %p555 = pneg %p247
        %p556 = pneg %p244
        %p557 = pneg %p268
        %p558 = pneg %p265
        %p559 = pneg %p289
        %p560 = pneg %p286
        %p561 = pneg %p310
        %p562 = pneg %p307
        %p563 = pneg %p331
        %p564 = pneg %p328
        %p565 = pneg %p352
        %p566 = pneg %p349
        %p567 = pneg %p373
        %p568 = pneg %p370
        %p569 = pneg %p394
        %p570 = pneg %p391
        %p571 = pneg %p415
        %p572 = pneg %p412
        %p573 = pneg %p441
        %p574 = pneg %p438
        %s575 = sand.u32 %s428, 1
        %s576 = scalar_lea.sflag [#allocation3], %s575
        %s577 = sand.u32 %s428, 1
        %s578 = smul.addr %s577, 8
        %s579 = scalar_lea.vmem [#allocation2], %s578
        %p580 = scmp.lt.s32.totalorder %s32, 1
        %s581 = scalar_select %p580, %s32, 1
        %s582 = smul.addr %s581, 8
        %s583 = scalar_lea.vmem %s0, %s582
        %p584 = scmp.lt.s32.totalorder %s32, 1
        %s585 = scalar_select %p584, %s32, 1
        %s586 = smul.addr %s585, 8
        %s587 = scalar_lea.vmem %s1, %s586
        %v588 = vld [vmem:[%s583] sm:$0xff]
        %v589 = vld [vmem:[%s587] sm:$0xff]
        %v590 = vld [vmem:[%s2] sm:$0x1]
        %v591 = vld [vmem:[%s3] sm:$0x1]
        %v592 = vld [vmem:[%s4] sm:$0xff]
        %v593 = vld [vmem:[%s4 + $0x8] sm:$0xff]
        %v594 = vld [vmem:[%s4 + $0x10] sm:$0xff]
        %v595 = vld [vmem:[%s4 + $0x18] sm:$0xff]
        %v596 = vld [vmem:[%s4 + $0x20] sm:$0xff]
        %v597 = vld [vmem:[%s4 + $0x28] sm:$0xff]
        %v598 = vld [vmem:[%s4 + $0x30] sm:$0xff]
        %v599 = vld [vmem:[%s4 + $0x38] sm:$0xff]
        %v600 = vld [vmem:[%s4 + $0x40] sm:$0xff]
        %v601 = vld [vmem:[%s4 + $0x48] sm:$0xff]
        %v602 = vld [vmem:[%s4 + $0x50] sm:$0xff]
        %v603 = vld [vmem:[%s4 + $0x58] sm:$0xff]
        %v604 = vld [vmem:[%s4 + $0x60] sm:$0xff]
        %v605 = vld [vmem:[%s4 + $0x68] sm:$0xff]
        %v606 = vld [vmem:[%s4 + $0x70] sm:$0xff]
        %v607 = vld [vmem:[%s4 + $0x78] sm:$0xff]
        %v608 = vld [vmem:[%s5] sm:$0x1]
        %v609 = vld [vmem:[%s5 + $0x1] sm:$0x1]
        %v610 = vld [vmem:[%s5 + $0x2] sm:$0x1]
        %v611 = vld [vmem:[%s5 + $0x3] sm:$0x1]
        %v612 = vld [vmem:[%s6] sm:$0xff]
        %v613 = vld [vmem:[%s6 + $0x8] sm:$0xff]
        %v614 = vld [vmem:[%s6 + $0x10] sm:$0xff]
        %v615 = vld [vmem:[%s6 + $0x18] sm:$0xff]
        %v616 = vld [vmem:[%s6 + $0x20] sm:$0xff]
        %v617 = vld [vmem:[%s6 + $0x28] sm:$0xff]
        %v618 = vld [vmem:[%s6 + $0x30] sm:$0xff]
        %v619 = vld [vmem:[%s6 + $0x38] sm:$0xff]
        %v620 = vld [vmem:[%s6 + $0x40] sm:$0xff]
        %v621 = vld [vmem:[%s6 + $0x48] sm:$0xff]
        %v622 = vld [vmem:[%s6 + $0x50] sm:$0xff]
        %v623 = vld [vmem:[%s6 + $0x58] sm:$0xff]
        %v624 = vld [vmem:[%s6 + $0x60] sm:$0xff]
        %v625 = vld [vmem:[%s6 + $0x68] sm:$0xff]
        %v626 = vld [vmem:[%s6 + $0x70] sm:$0xff]
        %v627 = vld [vmem:[%s6 + $0x78] sm:$0xff]
        %v628 = vld [vmem:[%s7] sm:$0x1]
        %v629 = vld [vmem:[%s7 + $0x1] sm:$0x1]
        %v630 = vld [vmem:[%s7 + $0x2] sm:$0x1]
        %v631 = vld [vmem:[%s7 + $0x3] sm:$0x1]
        %v632 = vld [vmem:[%s8] sm:$0xff]
        %v633 = vld [vmem:[%s8 + $0x8] sm:$0xff]
        %v634 = vld [vmem:[%s8 + $0x10] sm:$0xff]
        %v635 = vld [vmem:[%s8 + $0x18] sm:$0xff]
        %v636 = vld [vmem:[%s8 + $0x20] sm:$0xff]
        %v637 = vld [vmem:[%s8 + $0x28] sm:$0xff]
        %v638 = vld [vmem:[%s8 + $0x30] sm:$0xff]
        %v639 = vld [vmem:[%s8 + $0x38] sm:$0xff]
        %v640 = vld [vmem:[%s8 + $0x40] sm:$0xff]
        %v641 = vld [vmem:[%s8 + $0x48] sm:$0xff]
        %v642 = vld [vmem:[%s8 + $0x50] sm:$0xff]
        %v643 = vld [vmem:[%s8 + $0x58] sm:$0xff]
        %v644 = vld [vmem:[%s8 + $0x60] sm:$0xff]
        %v645 = vld [vmem:[%s8 + $0x68] sm:$0xff]
        %v646 = vld [vmem:[%s8 + $0x70] sm:$0xff]
        %v647 = vld [vmem:[%s8 + $0x78] sm:$0xff]
        %v648 = vld [vmem:[%s9] sm:$0x1]
        %v649 = vld [vmem:[%s9 + $0x1] sm:$0x1]
        %v650 = vld [vmem:[%s9 + $0x2] sm:$0x1]
        %v651 = vld [vmem:[%s9 + $0x3] sm:$0x1]
        %v652 = vld [vmem:[%s10] sm:$0xff]
        %v653 = vld [vmem:[%s10 + $0x8] sm:$0xff]
        %v654 = vld [vmem:[%s10 + $0x10] sm:$0xff]
        %v655 = vld [vmem:[%s10 + $0x18] sm:$0xff]
        %v656 = vld [vmem:[%s11] sm:$0x1]
        %v657 = vld [vmem:[%s12] sm:$0x1]
        %v658 = vld [vmem:[%s13] sm:$0x1]
        %v659 = vld [vmem:[%s14] sm:$0xff]
        %v660 = vld [vmem:[%s14 + $0x8] sm:$0xff]
        %v661 = vld [vmem:[%s14 + $0x10] sm:$0xff]
        %v662 = vld [vmem:[%s14 + $0x18] sm:$0xff]
        %v663 = vld [vmem:[%s15] sm:$0x1]
        %v664 = vld [vmem:[%s16] sm:$0xff]
        %v665 = vld [vmem:[%s16 + $0x8] sm:$0xff]
        %v666 = vld [vmem:[%s16 + $0x10] sm:$0xff]
        %v667 = vld [vmem:[%s16 + $0x18] sm:$0xff]
        %v668 = vld [vmem:[%s16 + $0x20] sm:$0xff]
        %v669 = vld [vmem:[%s16 + $0x28] sm:$0xff]
        %v670 = vld [vmem:[%s16 + $0x30] sm:$0xff]
        %v671 = vld [vmem:[%s16 + $0x38] sm:$0xff]
        %v672 = vld [vmem:[%s17] sm:$0x1]
        %vm673 = vcmask 261120
        %v674 = vsel %vm673, %v588, 0.0
        %675 = vadd.xlane.f32.xlu0 %v674
        %v676 = vpop.xlane.xlu0 %675
        %v677 = vrcp.pop 32.0
        %v678 = vmul.f32 32.0, %v677
        %v679 = vsub.f32 1.0, %v678
        %v680 = vmul.f32 %v677, %v679
        %v681 = vadd.f32 %v677, %v680
        %vm682 = vweird.f32 %v677
        %v683 = vsel %vm682, %v677, %v681
        %v684 = vmul.f32 %v676, %v683
        %v685 = vsub.f32 %v588, %v684
        %v686 = vmul.f32 %v685, %v685
        %v687 = vsel %vm673, %v686, 0.0
        %688 = vadd.xlane.f32.xlu0 %v687
        %v689 = vpop.xlane.xlu0 %688
        %v690 = vmul.f32 %v689, %v683
        %v691 = vadd.f32 %v690, 1e-06
        %v692 = vrsqrt.pop %v691
        %v693 = vmul.f32 %v692, %v691
        %v694 = vmul.f32 %v693, %v692
        %v695 = vmul.f32 0.5, %v694
        %v696 = vsub.f32 1.5, %v695
        %v697 = vmul.f32 %v692, %v696
        %vm698 = vweird.f32 %v691
        %vm699 = vweird.f32 %v692
        %vm700 = vmor %vm698, %vm699
        %v701 = vsel %vm700, %v692, %v697
        %v702 = vmul.f32 %v685, %v701
        %v704 = vperm.slane %v590, 0
        %v706 = vmul.f32 %v702, %v704
        %v708 = vperm.slane %v591, 0
        %v710 = vadd.f32 %v706, %v708
        %v715 = vperm.slane %v608, 0
        %v716 = vperm.slane %v609, 0
        %v717 = vperm.slane %v610, 0
        %v718 = vperm.slane %v611, 0
        %v724 = vsel %vm673, %v710, 0
        %726 = vmatpush.msra.mxu0 0.0
        %727 = vmatpush.msra.mxu0 0.0
        %728 = vmatpush.msra.mxu0 0.0
        %729 = vmatpush.msra.mxu0 0.0
        %730 = vmatpush.msra.mxu0 0.0
        %731 = vmatpush.msra.mxu0 0.0
        %732 = vmatpush.msra.mxu0 0.0
        %733 = vmatpush.msra.mxu0 0.0
        %734 = vmatpush.msra.mxu0 0.0
        %735 = vmatpush.msra.mxu0 0.0
        %736 = vmatpush.msra.mxu0 0.0
        %737 = vmatpush.msra.mxu0 0.0
        %738 = vmatpush.msra.mxu0 %v595
        %739 = vmatpush.msra.mxu0 %v594
        %740 = vmatpush.msra.mxu0 %v593
        %741 = vmatpush.msra.mxu0 %v592
        %742 = vmatmul.f32.gmra.mxu0 %v724
        %v743 = vpop.f32.mrf.mxu0
        %v744 = vadd.f32 %v715, %v743
        %745 = vdwg.mxu0
        %746 = vmatpush.msra.mxu0 0.0
        %747 = vmatpush.msra.mxu0 0.0
        %748 = vmatpush.msra.mxu0 0.0
        %749 = vmatpush.msra.mxu0 0.0
        %750 = vmatpush.msra.mxu0 0.0
        %751 = vmatpush.msra.mxu0 0.0
        %752 = vmatpush.msra.mxu0 0.0
        %753 = vmatpush.msra.mxu0 0.0
        %754 = vmatpush.msra.mxu0 0.0
        %755 = vmatpush.msra.mxu0 0.0
        %756 = vmatpush.msra.mxu0 0.0
        %757 = vmatpush.msra.mxu0 0.0
        %758 = vmatpush.msra.mxu0 %v599
        %759 = vmatpush.msra.mxu0 %v598
        %760 = vmatpush.msra.mxu0 %v597
        %761 = vmatpush.msra.mxu0 %v596
        %762 = vmatmul.f32.gmra.mxu0 %v724
        %v763 = vpop.f32.mrf.mxu0
        %v764 = vadd.f32 %v716, %v763
        %765 = vdwg.mxu0
        %766 = vmatpush.msra.mxu0 0.0
        %767 = vmatpush.msra.mxu0 0.0
        %768 = vmatpush.msra.mxu0 0.0
        %769 = vmatpush.msra.mxu0 0.0
        %770 = vmatpush.msra.mxu0 0.0
        %771 = vmatpush.msra.mxu0 0.0
        %772 = vmatpush.msra.mxu0 0.0
        %773 = vmatpush.msra.mxu0 0.0
        %774 = vmatpush.msra.mxu0 0.0
        %775 = vmatpush.msra.mxu0 0.0
        %776 = vmatpush.msra.mxu0 0.0
        %777 = vmatpush.msra.mxu0 0.0
        %778 = vmatpush.msra.mxu0 %v603
        %779 = vmatpush.msra.mxu0 %v602
        %780 = vmatpush.msra.mxu0 %v601
        %781 = vmatpush.msra.mxu0 %v600
        %782 = vmatmul.f32.gmra.mxu0 %v724
        %v783 = vpop.f32.mrf.mxu0
        %v784 = vadd.f32 %v717, %v783
        %785 = vdwg.mxu0
        %786 = vmatpush.msra.mxu0 0.0
        %787 = vmatpush.msra.mxu0 0.0
        %788 = vmatpush.msra.mxu0 0.0
        %789 = vmatpush.msra.mxu0 0.0
        %790 = vmatpush.msra.mxu0 0.0
        %791 = vmatpush.msra.mxu0 0.0
        %792 = vmatpush.msra.mxu0 0.0
        %793 = vmatpush.msra.mxu0 0.0
        %794 = vmatpush.msra.mxu0 0.0
        %795 = vmatpush.msra.mxu0 0.0
        %796 = vmatpush.msra.mxu0 0.0
        %797 = vmatpush.msra.mxu0 0.0
        %798 = vmatpush.msra.mxu0 %v607
        %799 = vmatpush.msra.mxu0 %v606
        %800 = vmatpush.msra.mxu0 %v605
        %801 = vmatpush.msra.mxu0 %v604
        %802 = vmatmul.f32.gmra.mxu0 %v724
        %v803 = vpop.f32.mrf.mxu0
        %v804 = vadd.f32 %v718, %v803
        %805 = vdwg.mxu0
        %v810 = vperm.slane %v628, 0
        %v811 = vperm.slane %v629, 0
        %v812 = vperm.slane %v630, 0
        %v813 = vperm.slane %v631, 0
        %818 = vmatpush.msra.mxu0 0.0
        %819 = vmatpush.msra.mxu0 0.0
        %820 = vmatpush.msra.mxu0 0.0
        %821 = vmatpush.msra.mxu0 0.0
        %822 = vmatpush.msra.mxu0 0.0
        %823 = vmatpush.msra.mxu0 0.0
        %824 = vmatpush.msra.mxu0 0.0
        %825 = vmatpush.msra.mxu0 0.0
        %826 = vmatpush.msra.mxu0 0.0
        %827 = vmatpush.msra.mxu0 0.0
        %828 = vmatpush.msra.mxu0 0.0
        %829 = vmatpush.msra.mxu0 0.0
        %830 = vmatpush.msra.mxu0 %v615
        %831 = vmatpush.msra.mxu0 %v614
        %832 = vmatpush.msra.mxu0 %v613
        %833 = vmatpush.msra.mxu0 %v612
        %834 = vmatmul.f32.gmra.mxu0 %v724
        %v835 = vpop.f32.mrf.mxu0
        %v836 = vadd.f32 %v810, %v835
        %837 = vdwg.mxu0
        %838 = vmatpush.msra.mxu0 0.0
        %839 = vmatpush.msra.mxu0 0.0
        %840 = vmatpush.msra.mxu0 0.0
        %841 = vmatpush.msra.mxu0 0.0
        %842 = vmatpush.msra.mxu0 0.0
        %843 = vmatpush.msra.mxu0 0.0
        %844 = vmatpush.msra.mxu0 0.0
        %845 = vmatpush.msra.mxu0 0.0
        %846 = vmatpush.msra.mxu0 0.0
        %847 = vmatpush.msra.mxu0 0.0
        %848 = vmatpush.msra.mxu0 0.0
        %849 = vmatpush.msra.mxu0 0.0
        %850 = vmatpush.msra.mxu0 %v619
        %851 = vmatpush.msra.mxu0 %v618
        %852 = vmatpush.msra.mxu0 %v617
        %853 = vmatpush.msra.mxu0 %v616
        %854 = vmatmul.f32.gmra.mxu0 %v724
        %v855 = vpop.f32.mrf.mxu0
        %v856 = vadd.f32 %v811, %v855
        %857 = vdwg.mxu0
        %858 = vmatpush.msra.mxu0 0.0
        %859 = vmatpush.msra.mxu0 0.0
        %860 = vmatpush.msra.mxu0 0.0
        %861 = vmatpush.msra.mxu0 0.0
        %862 = vmatpush.msra.mxu0 0.0
        %863 = vmatpush.msra.mxu0 0.0
        %864 = vmatpush.msra.mxu0 0.0
        %865 = vmatpush.msra.mxu0 0.0
        %866 = vmatpush.msra.mxu0 0.0
        %867 = vmatpush.msra.mxu0 0.0
        %868 = vmatpush.msra.mxu0 0.0
        %869 = vmatpush.msra.mxu0 0.0
        %870 = vmatpush.msra.mxu0 %v623
        %871 = vmatpush.msra.mxu0 %v622
        %872 = vmatpush.msra.mxu0 %v621
        %873 = vmatpush.msra.mxu0 %v620
        %874 = vmatmul.f32.gmra.mxu0 %v724
        %v875 = vpop.f32.mrf.mxu0
        %v876 = vadd.f32 %v812, %v875
        %877 = vdwg.mxu0
        %878 = vmatpush.msra.mxu0 0.0
        %879 = vmatpush.msra.mxu0 0.0
        %880 = vmatpush.msra.mxu0 0.0
        %881 = vmatpush.msra.mxu0 0.0
        %882 = vmatpush.msra.mxu0 0.0
        %883 = vmatpush.msra.mxu0 0.0
        %884 = vmatpush.msra.mxu0 0.0
        %885 = vmatpush.msra.mxu0 0.0
        %886 = vmatpush.msra.mxu0 0.0
        %887 = vmatpush.msra.mxu0 0.0
        %888 = vmatpush.msra.mxu0 0.0
        %889 = vmatpush.msra.mxu0 0.0
        %890 = vmatpush.msra.mxu0 %v627
        %891 = vmatpush.msra.mxu0 %v626
        %892 = vmatpush.msra.mxu0 %v625
        %893 = vmatpush.msra.mxu0 %v624
        %894 = vmatmul.f32.gmra.mxu0 %v724
        %v895 = vpop.f32.mrf.mxu0
        %v896 = vadd.f32 %v813, %v895
        %897 = vdwg.mxu0
        %v902 = vperm.slane %v648, 0
        %v903 = vperm.slane %v649, 0
        %v904 = vperm.slane %v650, 0
        %v905 = vperm.slane %v651, 0
        %910 = vmatpush.msra.mxu0 0.0
        %911 = vmatpush.msra.mxu0 0.0
        %912 = vmatpush.msra.mxu0 0.0
        %913 = vmatpush.msra.mxu0 0.0
        %914 = vmatpush.msra.mxu0 0.0
        %915 = vmatpush.msra.mxu0 0.0
        %916 = vmatpush.msra.mxu0 0.0
        %917 = vmatpush.msra.mxu0 0.0
        %918 = vmatpush.msra.mxu0 0.0
        %919 = vmatpush.msra.mxu0 0.0
        %920 = vmatpush.msra.mxu0 0.0
        %921 = vmatpush.msra.mxu0 0.0
        %922 = vmatpush.msra.mxu0 %v635
        %923 = vmatpush.msra.mxu0 %v634
        %924 = vmatpush.msra.mxu0 %v633
        %925 = vmatpush.msra.mxu0 %v632
        %926 = vmatmul.f32.gmra.mxu0 %v724
        %v927 = vpop.f32.mrf.mxu0
        %v928 = vadd.f32 %v902, %v927
        %929 = vdwg.mxu0
        %930 = vmatpush.msra.mxu0 0.0
        %931 = vmatpush.msra.mxu0 0.0
        %932 = vmatpush.msra.mxu0 0.0
        %933 = vmatpush.msra.mxu0 0.0
        %934 = vmatpush.msra.mxu0 0.0
        %935 = vmatpush.msra.mxu0 0.0
        %936 = vmatpush.msra.mxu0 0.0
        %937 = vmatpush.msra.mxu0 0.0
        %938 = vmatpush.msra.mxu0 0.0
        %939 = vmatpush.msra.mxu0 0.0
        %940 = vmatpush.msra.mxu0 0.0
        %941 = vmatpush.msra.mxu0 0.0
        %942 = vmatpush.msra.mxu0 %v639
        %943 = vmatpush.msra.mxu0 %v638
        %944 = vmatpush.msra.mxu0 %v637
        %945 = vmatpush.msra.mxu0 %v636
        %946 = vmatmul.f32.gmra.mxu0 %v724
        %v947 = vpop.f32.mrf.mxu0
        %v948 = vadd.f32 %v903, %v947
        %949 = vdwg.mxu0
        %950 = vmatpush.msra.mxu0 0.0
        %951 = vmatpush.msra.mxu0 0.0
        %952 = vmatpush.msra.mxu0 0.0
        %953 = vmatpush.msra.mxu0 0.0
        %954 = vmatpush.msra.mxu0 0.0
        %955 = vmatpush.msra.mxu0 0.0
        %956 = vmatpush.msra.mxu0 0.0
        %957 = vmatpush.msra.mxu0 0.0
        %958 = vmatpush.msra.mxu0 0.0
        %959 = vmatpush.msra.mxu0 0.0
        %960 = vmatpush.msra.mxu0 0.0
        %961 = vmatpush.msra.mxu0 0.0
        %962 = vmatpush.msra.mxu0 %v643
        %963 = vmatpush.msra.mxu0 %v642
        %964 = vmatpush.msra.mxu0 %v641
        %965 = vmatpush.msra.mxu0 %v640
        %966 = vmatmul.f32.gmra.mxu0 %v724
        %v967 = vpop.f32.mrf.mxu0
        %v968 = vadd.f32 %v904, %v967
        %969 = vdwg.mxu0
        %970 = vmatpush.msra.mxu0 0.0
        %971 = vmatpush.msra.mxu0 0.0
        %972 = vmatpush.msra.mxu0 0.0
        %973 = vmatpush.msra.mxu0 0.0
        %974 = vmatpush.msra.mxu0 0.0
        %975 = vmatpush.msra.mxu0 0.0
        %976 = vmatpush.msra.mxu0 0.0
        %977 = vmatpush.msra.mxu0 0.0
        %978 = vmatpush.msra.mxu0 0.0
        %979 = vmatpush.msra.mxu0 0.0
        %980 = vmatpush.msra.mxu0 0.0
        %981 = vmatpush.msra.mxu0 0.0
        %982 = vmatpush.msra.mxu0 %v647
        %983 = vmatpush.msra.mxu0 %v646
        %984 = vmatpush.msra.mxu0 %v645
        %985 = vmatpush.msra.mxu0 %v644
        %986 = vmatmul.f32.gmra.mxu0 %v724
        %v987 = vpop.f32.mrf.mxu0
        %v988 = vadd.f32 %v905, %v987
        %989 = vdwg.mxu0
        %vm990 = vcmask 64512
        %v992 = vsel %vm990, %v744, 0
        %v995 = vsel %vm990, %v836, 0
        %997 = vmatpush.xpose.msra.mxu0 0.0
        %998 = vmatpush.xpose.msra.mxu0 0.0
        %999 = vmatpush.xpose.msra.mxu0 0.0
        %1000 = vmatpush.xpose.msra.mxu0 0.0
        %1001 = vmatpush.xpose.msra.mxu0 0.0
        %1002 = vmatpush.xpose.msra.mxu0 0.0
        %1003 = vmatpush.xpose.msra.mxu0 0.0
        %1004 = vmatpush.xpose.msra.mxu0 0.0
        %1005 = vmatpush.xpose.msra.mxu0 0.0
        %1006 = vmatpush.xpose.msra.mxu0 0.0
        %1007 = vmatpush.xpose.msra.mxu0 0.0
        %1008 = vmatpush.xpose.msra.mxu0 0.0
        %1009 = vmatpush.xpose.msra.mxu0 0.0
        %1010 = vmatpush.xpose.msra.mxu0 0.0
        %1011 = vmatpush.xpose.msra.mxu0 0.0
        %1012 = vmatpush.xpose.msra.mxu0 %v995
        %1013 = vmatmul.f32.gmra.mxu0 %v992
        %v1014 = vpop.f32.mrf.mxu0
        %v1015 = vadd.f32 0.0, %v1014
        %1016 = vdwg.mxu0
        %v1018 = vsel %vm990, %v764, 0
        %v1021 = vsel %vm990, %v856, 0
        %1023 = vmatpush.xpose.msra.mxu0 0.0
        %1024 = vmatpush.xpose.msra.mxu0 0.0
        %1025 = vmatpush.xpose.msra.mxu0 0.0
        %1026 = vmatpush.xpose.msra.mxu0 0.0
        %1027 = vmatpush.xpose.msra.mxu0 0.0
        %1028 = vmatpush.xpose.msra.mxu0 0.0
        %1029 = vmatpush.xpose.msra.mxu0 0.0
        %1030 = vmatpush.xpose.msra.mxu0 0.0
        %1031 = vmatpush.xpose.msra.mxu0 0.0
        %1032 = vmatpush.xpose.msra.mxu0 0.0
        %1033 = vmatpush.xpose.msra.mxu0 0.0
        %1034 = vmatpush.xpose.msra.mxu0 0.0
        %1035 = vmatpush.xpose.msra.mxu0 0.0
        %1036 = vmatpush.xpose.msra.mxu0 0.0
        %1037 = vmatpush.xpose.msra.mxu0 0.0
        %1038 = vmatpush.xpose.msra.mxu0 %v1021
        %1039 = vmatmul.f32.gmra.mxu0 %v1018
        %v1040 = vpop.f32.mrf.mxu0
        %v1041 = vadd.f32 0.0, %v1040
        %1042 = vdwg.mxu0
        %v1044 = vsel %vm990, %v784, 0
        %v1047 = vsel %vm990, %v876, 0
        %1049 = vmatpush.xpose.msra.mxu0 0.0
        %1050 = vmatpush.xpose.msra.mxu0 0.0
        %1051 = vmatpush.xpose.msra.mxu0 0.0
        %1052 = vmatpush.xpose.msra.mxu0 0.0
        %1053 = vmatpush.xpose.msra.mxu0 0.0
        %1054 = vmatpush.xpose.msra.mxu0 0.0
        %1055 = vmatpush.xpose.msra.mxu0 0.0
        %1056 = vmatpush.xpose.msra.mxu0 0.0
        %1057 = vmatpush.xpose.msra.mxu0 0.0
        %1058 = vmatpush.xpose.msra.mxu0 0.0
        %1059 = vmatpush.xpose.msra.mxu0 0.0
        %1060 = vmatpush.xpose.msra.mxu0 0.0
        %1061 = vmatpush.xpose.msra.mxu0 0.0
        %1062 = vmatpush.xpose.msra.mxu0 0.0
        %1063 = vmatpush.xpose.msra.mxu0 0.0
        %1064 = vmatpush.xpose.msra.mxu0 %v1047
        %1065 = vmatmul.f32.gmra.mxu0 %v1044
        %v1066 = vpop.f32.mrf.mxu0
        %v1067 = vadd.f32 0.0, %v1066
        %1068 = vdwg.mxu0
        %v1070 = vsel %vm990, %v804, 0
        %v1073 = vsel %vm990, %v896, 0
        %1075 = vmatpush.xpose.msra.mxu0 0.0
        %1076 = vmatpush.xpose.msra.mxu0 0.0
        %1077 = vmatpush.xpose.msra.mxu0 0.0
        %1078 = vmatpush.xpose.msra.mxu0 0.0
        %1079 = vmatpush.xpose.msra.mxu0 0.0
        %1080 = vmatpush.xpose.msra.mxu0 0.0
        %1081 = vmatpush.xpose.msra.mxu0 0.0
        %1082 = vmatpush.xpose.msra.mxu0 0.0
        %1083 = vmatpush.xpose.msra.mxu0 0.0
        %1084 = vmatpush.xpose.msra.mxu0 0.0
        %1085 = vmatpush.xpose.msra.mxu0 0.0
        %1086 = vmatpush.xpose.msra.mxu0 0.0
        %1087 = vmatpush.xpose.msra.mxu0 0.0
        %1088 = vmatpush.xpose.msra.mxu0 0.0
        %1089 = vmatpush.xpose.msra.mxu0 0.0
        %1090 = vmatpush.xpose.msra.mxu0 %v1073
        %1091 = vmatmul.f32.gmra.mxu0 %v1070
        %v1092 = vpop.f32.mrf.mxu0
        %v1093 = vadd.f32 0.0, %v1092
        %1094 = vdwg.mxu0
        %v1095 = vmul.f32 %v1015, 0.35355338
        %v1096 = vmul.f32 %v1041, 0.35355338
        %v1097 = vmul.f32 %v1067, 0.35355338
        %v1098 = vmul.f32 %v1093, 0.35355338
        %v1099 = vadd.f32 %v1095, %v589
        %v1100 = vadd.f32 %v1096, %v589
        %v1101 = vadd.f32 %v1097, %v589
        %v1102 = vadd.f32 %v1098, %v589
        %v1103 = vsel %vm990, %v1099, -inf
        %1104 = vmax.xlane.f32.xlu0 %v1103
        %v1105 = vpop.xlane.xlu0 %1104
        %v1106 = vsel %vm990, %v1100, -inf
        %1107 = vmax.xlane.f32.xlu0 %v1106
        %v1108 = vpop.xlane.xlu0 %1107
        %v1109 = vsel %vm990, %v1101, -inf
        %1110 = vmax.xlane.f32.xlu0 %v1109
        %v1111 = vpop.xlane.xlu0 %1110
        %v1112 = vsel %vm990, %v1102, -inf
        %1113 = vmax.xlane.f32.xlu0 %v1112
        %v1114 = vpop.xlane.xlu0 %1113
        %v1115 = vsub.f32 %v1099, %v1105
        %v1116 = vsub.f32 %v1100, %v1108
        %v1117 = vsub.f32 %v1101, %v1111
        %v1118 = vsub.f32 %v1102, %v1114
        %v1119 = vmul.f32 %v1115, 1.442695
        %v1120 = vpow.pop %v1119
        %v1121 = vmul.f32 %v1116, 1.442695
        %v1122 = vpow.pop %v1121
        %v1123 = vmul.f32 %v1117, 1.442695
        %v1124 = vpow.pop %v1123
        %v1125 = vmul.f32 %v1118, 1.442695
        %v1126 = vpow.pop %v1125
        %v1127 = vsel %vm990, %v1120, 0.0
        %1128 = vadd.xlane.f32.xlu0 %v1127
        %v1129 = vpop.xlane.xlu0 %1128
        %v1130 = vsel %vm990, %v1122, 0.0
        %1131 = vadd.xlane.f32.xlu0 %v1130
        %v1132 = vpop.xlane.xlu0 %1131
        %v1133 = vsel %vm990, %v1124, 0.0
        %1134 = vadd.xlane.f32.xlu0 %v1133
        %v1135 = vpop.xlane.xlu0 %1134
        %v1136 = vsel %vm990, %v1126, 0.0
        %1137 = vadd.xlane.f32.xlu0 %v1136
        %v1138 = vpop.xlane.xlu0 %1137
        %v1139 = vrcp.pop %v1129
        %v1140 = vrcp.pop %v1132
        %v1141 = vrcp.pop %v1135
        %v1142 = vrcp.pop %v1138
        %v1143 = vmul.f32 %v1120, %v1139
        %v1144 = vmul.f32 %v1122, %v1140
        %v1145 = vmul.f32 %v1124, %v1141
        %v1146 = vmul.f32 %v1126, %v1142
        %v1148 = vsel %vm990, %v1143, 0
        %1150 = vmatpush.msra.mxu0 0.0
        %1151 = vmatpush.msra.mxu0 0.0
        %1152 = vmatpush.msra.mxu0 0.0
        %1153 = vmatpush.msra.mxu0 0.0
        %1154 = vmatpush.msra.mxu0 0.0
        %1155 = vmatpush.msra.mxu0 0.0
        %1156 = vmatpush.msra.mxu0 0.0
        %1157 = vmatpush.msra.mxu0 0.0
        %1158 = vmatpush.msra.mxu0 0.0
        %1159 = vmatpush.msra.mxu0 0.0
        %1160 = vmatpush.msra.mxu0 0.0
        %1161 = vmatpush.msra.mxu0 0.0
        %1162 = vmatpush.msra.mxu0 0.0
        %1163 = vmatpush.msra.mxu0 0.0
        %1164 = vmatpush.msra.mxu0 0.0
        %1165 = vmatpush.msra.mxu0 %v928
        %1166 = vmatmul.f32.gmra.mxu0 %v1148
        %v1167 = vpop.f32.mrf.mxu0
        %v1168 = vadd.f32 0.0, %v1167
        %1169 = vdwg.mxu0
        %v1171 = vsel %vm990, %v1144, 0
        %1173 = vmatpush.msra.mxu0 0.0
        %1174 = vmatpush.msra.mxu0 0.0
        %1175 = vmatpush.msra.mxu0 0.0
        %1176 = vmatpush.msra.mxu0 0.0
        %1177 = vmatpush.msra.mxu0 0.0
        %1178 = vmatpush.msra.mxu0 0.0
        %1179 = vmatpush.msra.mxu0 0.0
        %1180 = vmatpush.msra.mxu0 0.0
        %1181 = vmatpush.msra.mxu0 0.0
        %1182 = vmatpush.msra.mxu0 0.0
        %1183 = vmatpush.msra.mxu0 0.0
        %1184 = vmatpush.msra.mxu0 0.0
        %1185 = vmatpush.msra.mxu0 0.0
        %1186 = vmatpush.msra.mxu0 0.0
        %1187 = vmatpush.msra.mxu0 0.0
        %1188 = vmatpush.msra.mxu0 %v948
        %1189 = vmatmul.f32.gmra.mxu0 %v1171
        %v1190 = vpop.f32.mrf.mxu0
        %v1191 = vadd.f32 0.0, %v1190
        %1192 = vdwg.mxu0
        %v1194 = vsel %vm990, %v1145, 0
        %1196 = vmatpush.msra.mxu0 0.0
        %1197 = vmatpush.msra.mxu0 0.0
        %1198 = vmatpush.msra.mxu0 0.0
        %1199 = vmatpush.msra.mxu0 0.0
        %1200 = vmatpush.msra.mxu0 0.0
        %1201 = vmatpush.msra.mxu0 0.0
        %1202 = vmatpush.msra.mxu0 0.0
        %1203 = vmatpush.msra.mxu0 0.0
        %1204 = vmatpush.msra.mxu0 0.0
        %1205 = vmatpush.msra.mxu0 0.0
        %1206 = vmatpush.msra.mxu0 0.0
        %1207 = vmatpush.msra.mxu0 0.0
        %1208 = vmatpush.msra.mxu0 0.0
        %1209 = vmatpush.msra.mxu0 0.0
        %1210 = vmatpush.msra.mxu0 0.0
        %1211 = vmatpush.msra.mxu0 %v968
        %1212 = vmatmul.f32.gmra.mxu0 %v1194
        %v1213 = vpop.f32.mrf.mxu0
        %v1214 = vadd.f32 0.0, %v1213
        %1215 = vdwg.mxu0
        %v1217 = vsel %vm990, %v1146, 0
        %1219 = vmatpush.msra.mxu0 0.0
        %1220 = vmatpush.msra.mxu0 0.0
        %1221 = vmatpush.msra.mxu0 0.0
        %1222 = vmatpush.msra.mxu0 0.0
        %1223 = vmatpush.msra.mxu0 0.0
        %1224 = vmatpush.msra.mxu0 0.0
        %1225 = vmatpush.msra.mxu0 0.0
        %1226 = vmatpush.msra.mxu0 0.0
        %1227 = vmatpush.msra.mxu0 0.0
        %1228 = vmatpush.msra.mxu0 0.0
        %1229 = vmatpush.msra.mxu0 0.0
        %1230 = vmatpush.msra.mxu0 0.0
        %1231 = vmatpush.msra.mxu0 0.0
        %1232 = vmatpush.msra.mxu0 0.0
        %1233 = vmatpush.msra.mxu0 0.0
        %1234 = vmatpush.msra.mxu0 %v988
        %1235 = vmatmul.f32.gmra.mxu0 %v1217
        %v1236 = vpop.f32.mrf.mxu0
        %v1237 = vadd.f32 0.0, %v1236
        %1238 = vdwg.mxu0
        %v1240 = vsel %vm990, %v1168, 0
        %1242 = vmatpush.msra.mxu0 0.0
        %1243 = vmatpush.msra.mxu0 0.0
        %1244 = vmatpush.msra.mxu0 0.0
        %1245 = vmatpush.msra.mxu0 0.0
        %1246 = vmatpush.msra.mxu0 0.0
        %1247 = vmatpush.msra.mxu0 0.0
        %1248 = vmatpush.msra.mxu0 0.0
        %1249 = vmatpush.msra.mxu0 0.0
        %1250 = vmatpush.msra.mxu0 0.0
        %1251 = vmatpush.msra.mxu0 0.0
        %1252 = vmatpush.msra.mxu0 0.0
        %1253 = vmatpush.msra.mxu0 0.0
        %1254 = vmatpush.msra.mxu0 0.0
        %1255 = vmatpush.msra.mxu0 0.0
        %1256 = vmatpush.msra.mxu0 0.0
        %1257 = vmatpush.msra.mxu0 %v652
        %1258 = vmatmul.f32.gmra.mxu0 %v1240
        %v1259 = vpop.f32.mrf.mxu0
        %v1260 = vadd.f32 0.0, %v1259
        %1261 = vdwg.mxu0
        %v1263 = vsel %vm990, %v1191, 0
        %1265 = vmatpush.msra.mxu0 0.0
        %1266 = vmatpush.msra.mxu0 0.0
        %1267 = vmatpush.msra.mxu0 0.0
        %1268 = vmatpush.msra.mxu0 0.0
        %1269 = vmatpush.msra.mxu0 0.0
        %1270 = vmatpush.msra.mxu0 0.0
        %1271 = vmatpush.msra.mxu0 0.0
        %1272 = vmatpush.msra.mxu0 0.0
        %1273 = vmatpush.msra.mxu0 0.0
        %1274 = vmatpush.msra.mxu0 0.0
        %1275 = vmatpush.msra.mxu0 0.0
        %1276 = vmatpush.msra.mxu0 0.0
        %1277 = vmatpush.msra.mxu0 0.0
        %1278 = vmatpush.msra.mxu0 0.0
        %1279 = vmatpush.msra.mxu0 0.0
        %1280 = vmatpush.msra.mxu0 %v653
        %1281 = vmatmul.f32.gmra.mxu0 %v1263
        %v1282 = vpop.f32.mrf.mxu0
        %v1283 = vadd.f32 0.0, %v1282
        %1284 = vdwg.mxu0
        %v1286 = vsel %vm990, %v1214, 0
        %1288 = vmatpush.msra.mxu0 0.0
        %1289 = vmatpush.msra.mxu0 0.0
        %1290 = vmatpush.msra.mxu0 0.0
        %1291 = vmatpush.msra.mxu0 0.0
        %1292 = vmatpush.msra.mxu0 0.0
        %1293 = vmatpush.msra.mxu0 0.0
        %1294 = vmatpush.msra.mxu0 0.0
        %1295 = vmatpush.msra.mxu0 0.0
        %1296 = vmatpush.msra.mxu0 0.0
        %1297 = vmatpush.msra.mxu0 0.0
        %1298 = vmatpush.msra.mxu0 0.0
        %1299 = vmatpush.msra.mxu0 0.0
        %1300 = vmatpush.msra.mxu0 0.0
        %1301 = vmatpush.msra.mxu0 0.0
        %1302 = vmatpush.msra.mxu0 0.0
        %1303 = vmatpush.msra.mxu0 %v654
        %1304 = vmatmul.f32.gmra.mxu0 %v1286
        %v1305 = vpop.f32.mrf.mxu0
        %v1306 = vadd.f32 0.0, %v1305
        %1307 = vdwg.mxu0
        %v1309 = vsel %vm990, %v1237, 0
        %1311 = vmatpush.msra.mxu0 0.0
        %1312 = vmatpush.msra.mxu0 0.0
        %1313 = vmatpush.msra.mxu0 0.0
        %1314 = vmatpush.msra.mxu0 0.0
        %1315 = vmatpush.msra.mxu0 0.0
        %1316 = vmatpush.msra.mxu0 0.0
        %1317 = vmatpush.msra.mxu0 0.0
        %1318 = vmatpush.msra.mxu0 0.0
        %1319 = vmatpush.msra.mxu0 0.0
        %1320 = vmatpush.msra.mxu0 0.0
        %1321 = vmatpush.msra.mxu0 0.0
        %1322 = vmatpush.msra.mxu0 0.0
        %1323 = vmatpush.msra.mxu0 0.0
        %1324 = vmatpush.msra.mxu0 0.0
        %1325 = vmatpush.msra.mxu0 0.0
        %1326 = vmatpush.msra.mxu0 %v655
        %1327 = vmatmul.f32.gmra.mxu0 %v1309
        %v1328 = vpop.f32.mrf.mxu0
        %v1329 = vadd.f32 0.0, %v1328
        %1330 = vdwg.mxu0
        %v1331 = vsel %vm673, %v1260, 0.0
        %v1332 = vsel %vm673, %v1283, 0.0
        %v1333 = vadd.f32 %v1331, %v1332
        %v1334 = vsel %vm673, %v1306, 0.0
        %v1335 = vadd.f32 %v1333, %v1334
        %v1336 = vsel %vm673, %v1329, 0.0
        %v1337 = vadd.f32 %v1335, %v1336
        %v1339 = vperm.slane %v656, 0
        %v1341 = vadd.f32 %v1337, %v1339
        %v1342 = vadd.f32 %v588, %v1341
        %v1343 = vsel %vm673, %v1342, 0.0
        %1344 = vadd.xlane.f32.xlu0 %v1343
        %v1345 = vpop.xlane.xlu0 %1344
        %v1346 = vmul.f32 %v1345, %v683
        %v1347 = vsub.f32 %v1342, %v1346
        %v1348 = vmul.f32 %v1347, %v1347
        %v1349 = vsel %vm673, %v1348, 0.0
        %1350 = vadd.xlane.f32.xlu0 %v1349
        %v1351 = vpop.xlane.xlu0 %1350
        %v1352 = vmul.f32 %v1351, %v683
        %v1353 = vadd.f32 %v1352, 1e-06
        %v1354 = vrsqrt.pop %v1353
        %v1355 = vmul.f32 %v1354, %v1353
        %v1356 = vmul.f32 %v1355, %v1354
        %v1357 = vmul.f32 0.5, %v1356
        %v1358 = vsub.f32 1.5, %v1357
        %v1359 = vmul.f32 %v1354, %v1358
        %vm1360 = vweird.f32 %v1353
        %vm1361 = vweird.f32 %v1354
        %vm1362 = vmor %vm1360, %vm1361
        %v1363 = vsel %vm1362, %v1354, %v1359
        %v1364 = vmul.f32 %v1347, %v1363
        %v1366 = vperm.slane %v657, 0
        %v1368 = vmul.f32 %v1364, %v1366
        %v1370 = vperm.slane %v658, 0
        %v1372 = vadd.f32 %v1368, %v1370
        %v1374 = vperm.slane %v663, 0
        %v1377 = vsel %vm673, %v1372, 0
        %1379 = vmatpush.msra.mxu0 0.0
        %1380 = vmatpush.msra.mxu0 0.0
        %1381 = vmatpush.msra.mxu0 0.0
        %1382 = vmatpush.msra.mxu0 0.0
        %1383 = vmatpush.msra.mxu0 0.0
        %1384 = vmatpush.msra.mxu0 0.0
        %1385 = vmatpush.msra.mxu0 0.0
        %1386 = vmatpush.msra.mxu0 0.0
        %1387 = vmatpush.msra.mxu0 0.0
        %1388 = vmatpush.msra.mxu0 0.0
        %1389 = vmatpush.msra.mxu0 0.0
        %1390 = vmatpush.msra.mxu0 0.0
        %1391 = vmatpush.msra.mxu0 %v662
        %1392 = vmatpush.msra.mxu0 %v661
        %1393 = vmatpush.msra.mxu0 %v660
        %1394 = vmatpush.msra.mxu0 %v659
        %1395 = vmatmul.f32.gmra.mxu0 %v1377
        %v1396 = vpop.f32.mrf.mxu0
        %v1397 = vadd.f32 %v1374, %v1396
        %1398 = vdwg.mxu0
        %v1399 = vmul.f32 %v1397, 0.5
        %v1400 = vmul.f32 %v1397, 0.044715
        %v1401 = vmul.f32 %v1400, %v1397
        %v1402 = vmul.f32 %v1401, %v1397
        %v1403 = vadd.f32 %v1397, %v1402
        %v1404 = vmul.f32 %v1403, 0.7978846
        %v1405 = vtanh.pop %v1404
        %v1406 = vadd.f32 %v1405, 1.0
        %v1407 = vmul.f32 %v1399, %v1406
        %v1409 = vperm.slane %v672, 0
        %vm1411 = vcmask 523264
        %v1413 = vsel %vm1411, %v1407, 0
        %1415 = vmatpush.msra.mxu0 0.0
        %1416 = vmatpush.msra.mxu0 0.0
        %1417 = vmatpush.msra.mxu0 0.0
        %1418 = vmatpush.msra.mxu0 0.0
        %1419 = vmatpush.msra.mxu0 0.0
        %1420 = vmatpush.msra.mxu0 0.0
        %1421 = vmatpush.msra.mxu0 0.0
        %1422 = vmatpush.msra.mxu0 0.0
        %1423 = vmatpush.msra.mxu0 %v671
        %1424 = vmatpush.msra.mxu0 %v670
        %1425 = vmatpush.msra.mxu0 %v669
        %1426 = vmatpush.msra.mxu0 %v668
        %1427 = vmatpush.msra.mxu0 %v667
        %1428 = vmatpush.msra.mxu0 %v666
        %1429 = vmatpush.msra.mxu0 %v665
        %1430 = vmatpush.msra.mxu0 %v664
        %1431 = vmatmul.f32.gmra.mxu0 %v1413
        %v1432 = vpop.f32.mrf.mxu0
        %v1433 = vadd.f32 %v1409, %v1432
        %1434 = vdwg.mxu0
        %v1435 = vadd.f32 %v1342, %v1433
        %1436 = vst.msk [vmem:[%s579] sm:$0xff] %vm673, %v1435
        %s1437 = sand.u32 %s428, 1
        %s1438 = scalar_lea.sflag [#allocation3], %s1437
        %s1439 = sand.u32 %s428, 1
        %s1440 = smul.addr %s1439, 8
        %s1441 = scalar_lea.vmem [#allocation2], %s1440
        // Predicated region
        $region93: #{tpu_custom_call.1} parent=91 // pred_check
          %p1442 = pneg %p438
        $region94: #{tpu_custom_call.1} parent=91 // pred_check_branch
          %1444 = sbr.rel (%p1442) target = $region96
        $region95: #{tpu_custom_call.1} parent=91 // pred_region
          %1446 = vsyncadd %s1438, 0
          %s1447 = smul.addr %s32, 8
          %s1448 = scalar_lea.hbm %s18, %s1447
          %s1450 = sshll.u32 %s1441, 4
          %s1451 = int_to_ptr.vmem [resolvable:$true] %s1450
          %s1452 = sshll.u32 %s1448, 4
          %s1453 = int_to_ptr.hbm [resolvable:$true] %s1452
          %1455 = dma.vmem_to_hbm [thread:$0]  %s1451, 128, %s1453, %s1438
        $region96: #{tpu_custom_call.1} parent=91 // pred_fallthru
          _
      $region92: #{tpu_custom_call.1} parent=5 // pred_fallthru
        _
      %p1456 = scmp.le.s32.totalorder 2, %s27
      // Predicated region
      $region97: #{tpu_custom_call.1} parent=5 // pred_check
        %p1457 = pneg %p1456
      $region98: #{tpu_custom_call.1} parent=5 // pred_check_branch
        %1459 = sbr.rel (%p1457) target = $region100
      $region99: #{tpu_custom_call.1} parent=5 // pred_region
        %s1460 = ssub.s32 %s27, 2
        // Predicated region
        $region101: #{tpu_custom_call.1} parent=99 // pred_check
          %p1461 = pneg %p444
        $region102: #{tpu_custom_call.1} parent=99 // pred_check_branch
          %1463 = sbr.rel (%p1461) target = $region104
        $region103: #{tpu_custom_call.1} parent=99 // pred_region
          %s1464 = sand.u32 %s429, 1
          %s1465 = scalar_lea.sflag [#allocation3], %s1464
          %s1466 = sand.u32 %s429, 1
          %s1467 = smul.addr %s1466, 8
          %s1468 = scalar_lea.vmem [#allocation2], %s1467
          %1470 = dma.done %s1465, 128
        $region104: #{tpu_custom_call.1} parent=99 // pred_fallthru
          _
      $region100: #{tpu_custom_call.1} parent=5 // pred_fallthru
        _
    $region6: #{tpu_custom_call.1} parent=1 // loop_footer
      %s31 = sadd.s32 1, %s27
    $region7: #{tpu_custom_call.1} parent=1 // loop_footer_branch
      %26 = sbr.rel target = $region3
    $region8: #{tpu_custom_call.1} parent=1 // loop_exit
      _
    %1471 = vsyncpa [#allocation3], 1
    %s1472 = scalar_lea.sflag [#allocation3], 1
    %1473 = vsyncpa %s1472, 1

</llo_original>
